<compile_context>
chip_gen: v7x
topology: tpu7x:2x2x1
jax: 0.10.0
libtpu: 0.0.40
codegen_flags: <defaults>
</compile_context>

<pallas_src>
import jax
import jax.numpy as jnp
import numpy as np
from jax import lax
from jax.experimental import pallas as pl
from jax.experimental.pallas import tpu as pltpu


# ----------------------------------------------------------------------------
# Parameter construction (BN folded into weights)
# ----------------------------------------------------------------------------
def _fold_bn(gamma, beta, mean, var, eps=1e-5):
    scale = gamma / jnp.sqrt(var + eps)
    bias = beta - mean * scale
    return scale, bias


def init_params(key, in_planes, out_planes, expansion, stride):
    """Deterministic parameters; BN scales folded into the conv weights."""
    P = expansion * in_planes
    ks = jax.random.split(key, 8)

    def conv_w(k, cout, cin, kh, kw):
        return 0.1 * jax.random.normal(k, (cout, cin, kh, kw), jnp.float32)

    def bn_stats(k, c):
        k1, k2, k3, k4 = jax.random.split(k, 4)
        gamma = 1.0 + 0.1 * jax.random.normal(k1, (c,), jnp.float32)
        beta = 0.1 * jax.random.normal(k2, (c,), jnp.float32)
        mean = 0.1 * jax.random.normal(k3, (c,), jnp.float32)
        var = jax.random.uniform(k4, (c,), jnp.float32, minval=0.5, maxval=1.5)
        return gamma, beta, mean, var

    w1_pt = conv_w(ks[0], P, in_planes, 1, 1)        # (P, Cin, 1, 1)
    w2_pt = conv_w(ks[1], P, 1, 3, 3)                # (P, 1, 3, 3) depthwise
    w3_pt = conv_w(ks[2], out_planes, P, 1, 1)       # (Cout, P, 1, 1)
    s1, b1 = _fold_bn(*bn_stats(ks[3], P))
    s2, b2 = _fold_bn(*bn_stats(ks[4], P))
    s3, b3 = _fold_bn(*bn_stats(ks[5], out_planes))

    p = {
        # BN1/2/3 scales folded into the conv weights (pure wrapper precompute).
        "w1": w1_pt[:, :, 0, 0] * s1[:, None],                           # (P, Cin)
        "b1": b1[:, None],                                               # (P, 1)
        "w2": (w2_pt[:, 0].reshape(P, 9) * s2[:, None]).T[:, :, None],   # (9, P, 1)
        "b2": b2[:, None],                                               # (P, 1)
        "w3": w3_pt[:, :, 0, 0] * s3[:, None],                           # (Cout, P)
        "b3": b3[:, None],                                               # (Cout, 1)
    }
    if stride == 1 and in_planes != out_planes:
        ws_pt = conv_w(ks[6], out_planes, in_planes, 1, 1)
        ss, bs = _fold_bn(*bn_stats(ks[7], out_planes))
        p["ws"] = ws_pt[:, :, 0, 0] * ss[:, None]                        # (Cout, Cin)
        p["bs"] = bs[:, None]                                            # (Cout, 1)
    return p


# ----------------------------------------------------------------------------
# Host-side helpers
# ----------------------------------------------------------------------------
def _make_tap_masks(BT, H, W):
    """(9, 1, M) f32 validity masks for the 3x3 taps on the flattened
    (bt, y, x) lane axis.

    A lane is zeroed when its tap source lies outside the HxW grid of the
    *same* batch element -- this also zeroes every lane that a circular lane
    roll wraps (across batch elements inside the block and around the block
    ends), so pltpu.roll needs no extra masking.
    """
    M = BT * H * W
    lane = np.arange(M)
    xi = lane % W
    yi = (lane // W) % H
    masks = np.ones((9, 1, M), np.float32)
    for dy in range(3):
        for dx in range(3):
            ox, oy = dx - 1, dy - 1
            m = np.ones(M, bool)
            if ox == -1:
                m &= xi >= 1
            elif ox == 1:
                m &= xi <= W - 2
            if oy == -1:
                m &= yi >= 1
            elif oy == 1:
                m &= yi <= H - 2
            masks[dy * 3 + dx, 0] = m
    return jnp.asarray(masks)


def _pick_block_batch(N, H, W, P):
    """Pick BT (batch elements per grid step):
       1) keep ~3 live (P, M) f32 intermediates near the 64-vreg file (no spill),
       2) make M = BT*H*W a multiple of 128 (dense lane stores),
       3) keep >= 2 grid steps (pipelining / v7x megacore),
       4) then prefer the largest M (amortize ~0.35us per-step overhead)."""
    hw = H * W
    budget = 32768                      # P*M f32 elements; ~1.5x the vreg file
    divisors = [d for d in range(1, N + 1) if N % d == 0]

    def key(d):
        m = d * hw
        fits = (P * m) <= budget
        return (fits, m % 128 == 0, (N // d) >= 2, m if fits else -m)

    return max(divisors, key=key)


# ----------------------------------------------------------------------------
# Kernel
# ----------------------------------------------------------------------------
def _make_block_kernel(P, W, add_shortcut, proj_shortcut, use_bf16):
    mxu_dt = jnp.bfloat16 if use_bf16 else jnp.float32

    def kernel(x_ref, w1_ref, b1_ref, w2_ref, b2_ref, w3_ref, b3_ref,
               mask_ref, o_ref):
        # (Cin, M): channels on sublanes, flattened (bt, y, x) pixels on lanes.
        x = x_ref[0]
        M = x.shape[-1]

        # ---- 1x1 expand conv (+ packed projected shortcut), BN folded ----
        y = jnp.dot(w1_ref[...], x.astype(mxu_dt),
                    preferred_element_type=jnp.float32) + b1_ref[...]
        if proj_shortcut:
            t1 = jnp.maximum(y[:P], 0.0)          # (P, M), ReLU on expand part only
            sc = y[P:]                            # (Cout, M) projected shortcut
        else:
            t1 = jnp.maximum(y, 0.0)              # (P, M)
            sc = x                                # identity (used iff add_shortcut)

        # ---- 3x3 depthwise conv (padding=1), stride-1 resolution ----
        # Lane shifts via pltpu.roll (XLU slot); precomputed masks zero both the
        # out-of-image taps and every lane the circular roll wraps.
        acc = t1 * w2_ref[4]                      # center tap (dy=1, dx=1)
        for dy in range(3):
            for dx in range(3):
                if dy == 1 and dx == 1:
                    continue
                tap = dy * 3 + dx
                o = (dy - 1) * W + (dx - 1)       # source lane offset
                rolled = pltpu.roll(t1, shift=(-o) % M, axis=1)
                acc = acc + (rolled * mask_ref[tap]) * w2_ref[tap]

        t2 = jnp.maximum(acc + b2_ref[...], 0.0)  # BN2 scale already in w2

        # ---- 1x1 project conv (BN3 folded) + bias ----
        t3 = jnp.dot(w3_ref[...], t2.astype(mxu_dt),
                     preferred_element_type=jnp.float32) + b3_ref[...]

        if add_shortcut:
            t3 = t3 + sc

        o_ref[0] = t3                             # (Cout, M), lane-dense store

    return kernel


# ----------------------------------------------------------------------------
# Wrapper
# ----------------------------------------------------------------------------
def block_forward(x_nchw, p, *, stride, block_batch=None, use_bf16_matmul=False):
    N, Cin, H, W = x_nchw.shape
    P = p["w1"].shape[0]
    Cout = p["w3"].shape[0]
    add_shortcut = (stride == 1)
    proj_shortcut = add_shortcut and (Cin != Cout)
    if proj_shortcut:
        assert "ws" in p and "bs" in p, "projected shortcut params missing"
    if add_shortcut and not proj_shortcut:
        assert Cin == Cout, "identity shortcut requires Cin == Cout"

    BT = _pick_block_batch(N, H, W, P) if block_batch is None else block_batch
    assert N % BT == 0, "batch must be divisible by the batch tile"
    NB = N // BT
    M = BT * H * W

    # NCHW -> channels-first lane-dense blocks (NB, Cin, BT*H*W).
    x_cf = (x_nchw.reshape(NB, BT, Cin, H * W)
            .transpose(0, 2, 1, 3)
            .reshape(NB, Cin, M))

    # Pack the expand and projected-shortcut 1x1 convs into one matmul.
    if proj_shortcut:
        w1 = jnp.concatenate([p["w1"], p["ws"]], axis=0)   # (P+Cout, Cin)
        b1 = jnp.concatenate([p["b1"], p["bs"]], axis=0)   # (P+Cout, 1)
    else:
        w1, b1 = p["w1"], p["b1"]
    w3 = p["w3"]
    if use_bf16_matmul:
        # TODO(synk): bf16 MXU operands (v6e/v7x) need a looser tolerance than
        # the 2e-3 used in the self-test below; kept off by default.
        w1 = w1.astype(jnp.bfloat16)
        w3 = w3.astype(jnp.bfloat16)

    masks = _make_tap_masks(BT, H, W)

    args = [x_cf, w1, b1, p["w2"], p["b2"], w3, p["b3"], masks]

    def const_spec(a):
        nd = a.ndim
        return pl.BlockSpec(a.shape, lambda b, _nd=nd: (0,) * _nd)

    in_specs = [pl.BlockSpec((1, Cin, M), lambda b: (b, 0, 0))]
    in_specs += [const_spec(a) for a in args[1:]]

    kernel = _make_block_kernel(P, W, add_shortcut, proj_shortcut,
                                use_bf16_matmul)

    out_cf = pl.pallas_call(
        kernel,
        out_shape=jax.ShapeDtypeStruct((NB, Cout, M), jnp.float32),
        grid_spec=pltpu.PrefetchScalarGridSpec(
            num_scalar_prefetch=0,
            grid=(NB,),
            in_specs=in_specs,
            out_specs=pl.BlockSpec((1, Cout, M), lambda b: (b, 0, 0))),
        compiler_params=pltpu.CompilerParams(
            dimension_semantics=("parallel",)),
    )(*args)

    # Back to PyTorch-style NCHW.
    out = (out_cf.reshape(NB, Cout, BT, H * W)
           .transpose(0, 2, 1, 3)
           .reshape(N, Cout, H, W))
    if stride != 1:
        # Depthwise stride as a free wrapper-side ::s pick of the stride-1
        # output (replaces the one-hot downsample matmul of the old version).
        out = out[:, :, ::stride, ::stride]
    return out


# ----------------------------------------------------------------------------
# Pure-JAX (XLA) reference with identical folded-BN semantics
# ----------------------------------------------------------------------------
def block_ref(x_nchw, p, stride):
    N, Cin, H, W = x_nchw.shape
    P = p["w1"].shape[0]
    Cout = p["w3"].shape[0]
    hp = lax.Precision.HIGHEST

    t = jnp.einsum("pc,nchw->nphw", p["w1"], x_nchw, precision=hp)
    t = jnp.maximum(t + p["b1"].reshape(1, P, 1, 1), 0.0)

    w2 = p["w2"][:, :, 0].reshape(3, 3, P).transpose(2, 0, 1)[:, None, :, :]
    t2 = lax.conv_general_dilated(
        t, w2, window_strides=(stride, stride), padding=((1, 1), (1, 1)),
        dimension_numbers=("NCHW", "OIHW", "NCHW"),
        feature_group_count=P, precision=hp)
    t2 = jnp.maximum(t2 + p["b2"].reshape(1, P, 1, 1), 0.0)

    t3 = jnp.einsum("qp,nphw->nqhw", p["w3"], t2, precision=hp)
    t3 = t3 + p["b3"].reshape(1, Cout, 1, 1)

    if stride == 1:
        if Cin != Cout:
            sc = jnp.einsum("qc,nchw->nqhw", p["ws"], x_nchw, precision=hp)
            sc = sc + p["bs"].reshape(1, Cout, 1, 1)
        else:
            sc = x_nchw
        t3 = t3 + sc
    return t3


# ----------------------------------------------------------------------------
if __name__ == "__main__":
    key = jax.random.PRNGKey(0)

    configs = [
        # (N, in_planes, out_planes, expansion, stride, H, W)
        (8, 8, 16, 4, 1, 8, 8),   # projected shortcut  -> BT=4, NB=2, M=256
        (4, 16, 16, 2, 1, 8, 8),  # identity shortcut   -> BT=2, NB=2, M=128
        (4, 8, 16, 4, 2, 8, 8),   # stride 2            -> BT=2, NB=2, M=128
    ]

    for i, (N, cin, cout, exp, stride, H, W) in enumerate(configs):
        kcfg = jax.random.fold_in(key, i)
        kx, kp = jax.random.split(kcfg)

        x_nchw = jax.random.normal(kx, (N, cin, H, W), jnp.float32)
        params = init_params(kp, cin, cout, exp, stride)

        out = block_forward(x_nchw, params, stride=stride)
        jax.block_until_ready(out)

        ref = block_ref(x_nchw, params, stride)
        Ho = (H + 2 - 3) // stride + 1
        Wo = (W + 2 - 3) // stride + 1
        assert out.shape == (N, cout, Ho, Wo)
        np.testing.assert_allclose(np.asarray(out), np.asarray(ref),
                                   atol=2e-3, rtol=2e-3)

    print("KERNEL_OK")
</pallas_src>

<mosaic_0001>
module attributes {stable_mosaic.version = 11 : i64} {
  func.func @kernel(%arg0: i32, %arg1: memref<1x8x256xf32, #tpu.memory_space<vmem>>, %arg2: memref<48x8xf32, #tpu.memory_space<vmem>>, %arg3: memref<48x1xf32, #tpu.memory_space<vmem>>, %arg4: memref<9x32x1xf32, #tpu.memory_space<vmem>>, %arg5: memref<32x1xf32, #tpu.memory_space<vmem>>, %arg6: memref<16x32xf32, #tpu.memory_space<vmem>>, %arg7: memref<16x1xf32, #tpu.memory_space<vmem>>, %arg8: memref<9x1x256xf32, #tpu.memory_space<vmem>>, %arg9: memref<1x16x256xf32, #tpu.memory_space<vmem>>) attributes {dimension_semantics = [#tpu.dimension_semantics<parallel>], iteration_bounds = array<i64: 2>, scalar_prefetch = 0 : i64, scratch_operands = 0 : i64, tpu.core_type = #tpu.core_type<tc>, window_params = [{transform_indices = @transform_0, window_bounds = array<i64: 1, 8, 256>}, {pipeline_mode = #tpu.pipeline_mode<synchronous>, transform_indices = @transform_1, window_bounds = array<i64: 48, 8>}, {pipeline_mode = #tpu.pipeline_mode<synchronous>, transform_indices = @transform_2, window_bounds = array<i64: 48, 1>}, {pipeline_mode = #tpu.pipeline_mode<synchronous>, transform_indices = @transform_3, window_bounds = array<i64: 9, 32, 1>}, {pipeline_mode = #tpu.pipeline_mode<synchronous>, transform_indices = @transform_4, window_bounds = array<i64: 32, 1>}, {pipeline_mode = #tpu.pipeline_mode<synchronous>, transform_indices = @transform_5, window_bounds = array<i64: 16, 32>}, {pipeline_mode = #tpu.pipeline_mode<synchronous>, transform_indices = @transform_6, window_bounds = array<i64: 16, 1>}, {pipeline_mode = #tpu.pipeline_mode<synchronous>, transform_indices = @transform_7, window_bounds = array<i64: 9, 1, 256>}, {transform_indices = @transform_8, window_bounds = array<i64: 1, 16, 256>}]} {
    %c0 = arith.constant 0 : index
    %c0_0 = arith.constant 0 : index
    %c0_1 = arith.constant 0 : index
    %0 = vector.load %arg1[%c0, %c0_0, %c0_1] : memref<1x8x256xf32, #tpu.memory_space<vmem>>, vector<1x8x256xf32>
    %1 = vector.shape_cast %0 : vector<1x8x256xf32> to vector<8x256xf32>
    %c0_2 = arith.constant 0 : index
    %c0_3 = arith.constant 0 : index
    %2 = vector.load %arg2[%c0_2, %c0_3] : memref<48x8xf32, #tpu.memory_space<vmem>>, vector<48x8xf32>
    %cst = arith.constant dense<0.000000e+00> : vector<48x256xf32>
    %3 = tpu.matmul %2, %1, %cst {dimension_numbers = #tpu.dot_dimension_numbers<[1], [0], [0], [1], [0, 0, 1, 1], [], []>} : vector<48x8xf32>, vector<8x256xf32>, vector<48x256xf32> -> vector<48x256xf32>
    %c0_4 = arith.constant 0 : index
    %c0_5 = arith.constant 0 : index
    %4 = vector.load %arg3[%c0_4, %c0_5] : memref<48x1xf32, #tpu.memory_space<vmem>>, vector<48x1xf32>
    %5 = vector.broadcast %4 : vector<48x1xf32> to vector<48x256xf32>
    %6 = arith.addf %3, %5 : vector<48x256xf32>
    %7 = vector.extract_strided_slice %6 {offsets = [0, 0], sizes = [32, 256], strides = [1, 1]} : vector<48x256xf32> to vector<32x256xf32>
    %cst_6 = arith.constant 0.000000e+00 : f32
    %8 = vector.broadcast %cst_6 : f32 to vector<32x256xf32>
    %9 = arith.maximumf %7, %8 : vector<32x256xf32>
    %10 = vector.extract_strided_slice %6 {offsets = [32, 0], sizes = [16, 256], strides = [1, 1]} : vector<48x256xf32> to vector<16x256xf32>
    %c4 = arith.constant 4 : index
    %c0_7 = arith.constant 0 : index
    %c0_8 = arith.constant 0 : index
    %11 = vector.load %arg4[%c4, %c0_7, %c0_8] : memref<9x32x1xf32, #tpu.memory_space<vmem>>, vector<1x32x1xf32>
    %12 = vector.shape_cast %11 : vector<1x32x1xf32> to vector<32x1xf32>
    %13 = vector.broadcast %12 : vector<32x1xf32> to vector<32x256xf32>
    %14 = arith.mulf %9, %13 : vector<32x256xf32>
    %c9_i32 = arith.constant 9 : i32
    %15 = tpu.dynamic_rotate %9 by %c9_i32 dim 1 : vector<32x256xf32>, i32 -> vector<32x256xf32>
    %c0_9 = arith.constant 0 : index
    %c0_10 = arith.constant 0 : index
    %c0_11 = arith.constant 0 : index
    %16 = vector.load %arg8[%c0_9, %c0_10, %c0_11] : memref<9x1x256xf32, #tpu.memory_space<vmem>>, vector<1x1x256xf32>
    %17 = vector.shape_cast %16 : vector<1x1x256xf32> to vector<1x256xf32>
    %18 = vector.broadcast %17 : vector<1x256xf32> to vector<32x256xf32>
    %19 = arith.mulf %15, %18 : vector<32x256xf32>
    %c0_12 = arith.constant 0 : index
    %c0_13 = arith.constant 0 : index
    %c0_14 = arith.constant 0 : index
    %20 = vector.load %arg4[%c0_12, %c0_13, %c0_14] : memref<9x32x1xf32, #tpu.memory_space<vmem>>, vector<1x32x1xf32>
    %21 = vector.shape_cast %20 : vector<1x32x1xf32> to vector<32x1xf32>
    %22 = vector.broadcast %21 : vector<32x1xf32> to vector<32x256xf32>
    %23 = arith.mulf %19, %22 : vector<32x256xf32>
    %24 = arith.addf %14, %23 : vector<32x256xf32>
    %c8_i32 = arith.constant 8 : i32
    %25 = tpu.dynamic_rotate %9 by %c8_i32 dim 1 : vector<32x256xf32>, i32 -> vector<32x256xf32>
    %c1 = arith.constant 1 : index
    %c0_15 = arith.constant 0 : index
    %c0_16 = arith.constant 0 : index
    %26 = vector.load %arg8[%c1, %c0_15, %c0_16] : memref<9x1x256xf32, #tpu.memory_space<vmem>>, vector<1x1x256xf32>
    %27 = vector.shape_cast %26 : vector<1x1x256xf32> to vector<1x256xf32>
    %28 = vector.broadcast %27 : vector<1x256xf32> to vector<32x256xf32>
    %29 = arith.mulf %25, %28 : vector<32x256xf32>
    %c1_17 = arith.constant 1 : index
    %c0_18 = arith.constant 0 : index
    %c0_19 = arith.constant 0 : index
    %30 = vector.load %arg4[%c1_17, %c0_18, %c0_19] : memref<9x32x1xf32, #tpu.memory_space<vmem>>, vector<1x32x1xf32>
    %31 = vector.shape_cast %30 : vector<1x32x1xf32> to vector<32x1xf32>
    %32 = vector.broadcast %31 : vector<32x1xf32> to vector<32x256xf32>
    %33 = arith.mulf %29, %32 : vector<32x256xf32>
    %34 = arith.addf %24, %33 : vector<32x256xf32>
    %c7_i32 = arith.constant 7 : i32
    %35 = tpu.dynamic_rotate %9 by %c7_i32 dim 1 : vector<32x256xf32>, i32 -> vector<32x256xf32>
    %c2 = arith.constant 2 : index
    %c0_20 = arith.constant 0 : index
    %c0_21 = arith.constant 0 : index
    %36 = vector.load %arg8[%c2, %c0_20, %c0_21] : memref<9x1x256xf32, #tpu.memory_space<vmem>>, vector<1x1x256xf32>
    %37 = vector.shape_cast %36 : vector<1x1x256xf32> to vector<1x256xf32>
    %38 = vector.broadcast %37 : vector<1x256xf32> to vector<32x256xf32>
    %39 = arith.mulf %35, %38 : vector<32x256xf32>
    %c2_22 = arith.constant 2 : index
    %c0_23 = arith.constant 0 : index
    %c0_24 = arith.constant 0 : index
    %40 = vector.load %arg4[%c2_22, %c0_23, %c0_24] : memref<9x32x1xf32, #tpu.memory_space<vmem>>, vector<1x32x1xf32>
    %41 = vector.shape_cast %40 : vector<1x32x1xf32> to vector<32x1xf32>
    %42 = vector.broadcast %41 : vector<32x1xf32> to vector<32x256xf32>
    %43 = arith.mulf %39, %42 : vector<32x256xf32>
    %44 = arith.addf %34, %43 : vector<32x256xf32>
    %c1_i32 = arith.constant 1 : i32
    %45 = tpu.dynamic_rotate %9 by %c1_i32 dim 1 : vector<32x256xf32>, i32 -> vector<32x256xf32>
    %c3 = arith.constant 3 : index
    %c0_25 = arith.constant 0 : index
    %c0_26 = arith.constant 0 : index
    %46 = vector.load %arg8[%c3, %c0_25, %c0_26] : memref<9x1x256xf32, #tpu.memory_space<vmem>>, vector<1x1x256xf32>
    %47 = vector.shape_cast %46 : vector<1x1x256xf32> to vector<1x256xf32>
    %48 = vector.broadcast %47 : vector<1x256xf32> to vector<32x256xf32>
    %49 = arith.mulf %45, %48 : vector<32x256xf32>
    %c3_27 = arith.constant 3 : index
    %c0_28 = arith.constant 0 : index
    %c0_29 = arith.constant 0 : index
    %50 = vector.load %arg4[%c3_27, %c0_28, %c0_29] : memref<9x32x1xf32, #tpu.memory_space<vmem>>, vector<1x32x1xf32>
    %51 = vector.shape_cast %50 : vector<1x32x1xf32> to vector<32x1xf32>
    %52 = vector.broadcast %51 : vector<32x1xf32> to vector<32x256xf32>
    %53 = arith.mulf %49, %52 : vector<32x256xf32>
    %54 = arith.addf %44, %53 : vector<32x256xf32>
    %c255_i32 = arith.constant 255 : i32
    %55 = tpu.dynamic_rotate %9 by %c255_i32 dim 1 : vector<32x256xf32>, i32 -> vector<32x256xf32>
    %c5 = arith.constant 5 : index
    %c0_30 = arith.constant 0 : index
    %c0_31 = arith.constant 0 : index
    %56 = vector.load %arg8[%c5, %c0_30, %c0_31] : memref<9x1x256xf32, #tpu.memory_space<vmem>>, vector<1x1x256xf32>
    %57 = vector.shape_cast %56 : vector<1x1x256xf32> to vector<1x256xf32>
    %58 = vector.broadcast %57 : vector<1x256xf32> to vector<32x256xf32>
    %59 = arith.mulf %55, %58 : vector<32x256xf32>
    %c5_32 = arith.constant 5 : index
    %c0_33 = arith.constant 0 : index
    %c0_34 = arith.constant 0 : index
    %60 = vector.load %arg4[%c5_32, %c0_33, %c0_34] : memref<9x32x1xf32, #tpu.memory_space<vmem>>, vector<1x32x1xf32>
    %61 = vector.shape_cast %60 : vector<1x32x1xf32> to vector<32x1xf32>
    %62 = vector.broadcast %61 : vector<32x1xf32> to vector<32x256xf32>
    %63 = arith.mulf %59, %62 : vector<32x256xf32>
    %64 = arith.addf %54, %63 : vector<32x256xf32>
    %c249_i32 = arith.constant 249 : i32
    %65 = tpu.dynamic_rotate %9 by %c249_i32 dim 1 : vector<32x256xf32>, i32 -> vector<32x256xf32>
    %c6 = arith.constant 6 : index
    %c0_35 = arith.constant 0 : index
    %c0_36 = arith.constant 0 : index
    %66 = vector.load %arg8[%c6, %c0_35, %c0_36] : memref<9x1x256xf32, #tpu.memory_space<vmem>>, vector<1x1x256xf32>
    %67 = vector.shape_cast %66 : vector<1x1x256xf32> to vector<1x256xf32>
    %68 = vector.broadcast %67 : vector<1x256xf32> to vector<32x256xf32>
    %69 = arith.mulf %65, %68 : vector<32x256xf32>
    %c6_37 = arith.constant 6 : index
    %c0_38 = arith.constant 0 : index
    %c0_39 = arith.constant 0 : index
    %70 = vector.load %arg4[%c6_37, %c0_38, %c0_39] : memref<9x32x1xf32, #tpu.memory_space<vmem>>, vector<1x32x1xf32>
    %71 = vector.shape_cast %70 : vector<1x32x1xf32> to vector<32x1xf32>
    %72 = vector.broadcast %71 : vector<32x1xf32> to vector<32x256xf32>
    %73 = arith.mulf %69, %72 : vector<32x256xf32>
    %74 = arith.addf %64, %73 : vector<32x256xf32>
    %c248_i32 = arith.constant 248 : i32
    %75 = tpu.dynamic_rotate %9 by %c248_i32 dim 1 : vector<32x256xf32>, i32 -> vector<32x256xf32>
    %c7 = arith.constant 7 : index
    %c0_40 = arith.constant 0 : index
    %c0_41 = arith.constant 0 : index
    %76 = vector.load %arg8[%c7, %c0_40, %c0_41] : memref<9x1x256xf32, #tpu.memory_space<vmem>>, vector<1x1x256xf32>
    %77 = vector.shape_cast %76 : vector<1x1x256xf32> to vector<1x256xf32>
    %78 = vector.broadcast %77 : vector<1x256xf32> to vector<32x256xf32>
    %79 = arith.mulf %75, %78 : vector<32x256xf32>
    %c7_42 = arith.constant 7 : index
    %c0_43 = arith.constant 0 : index
    %c0_44 = arith.constant 0 : index
    %80 = vector.load %arg4[%c7_42, %c0_43, %c0_44] : memref<9x32x1xf32, #tpu.memory_space<vmem>>, vector<1x32x1xf32>
    %81 = vector.shape_cast %80 : vector<1x32x1xf32> to vector<32x1xf32>
    %82 = vector.broadcast %81 : vector<32x1xf32> to vector<32x256xf32>
    %83 = arith.mulf %79, %82 : vector<32x256xf32>
    %84 = arith.addf %74, %83 : vector<32x256xf32>
    %c247_i32 = arith.constant 247 : i32
    %85 = tpu.dynamic_rotate %9 by %c247_i32 dim 1 : vector<32x256xf32>, i32 -> vector<32x256xf32>
    %c8 = arith.constant 8 : index
    %c0_45 = arith.constant 0 : index
    %c0_46 = arith.constant 0 : index
    %86 = vector.load %arg8[%c8, %c0_45, %c0_46] : memref<9x1x256xf32, #tpu.memory_space<vmem>>, vector<1x1x256xf32>
    %87 = vector.shape_cast %86 : vector<1x1x256xf32> to vector<1x256xf32>
    %88 = vector.broadcast %87 : vector<1x256xf32> to vector<32x256xf32>
    %89 = arith.mulf %85, %88 : vector<32x256xf32>
    %c8_47 = arith.constant 8 : index
    %c0_48 = arith.constant 0 : index
    %c0_49 = arith.constant 0 : index
    %90 = vector.load %arg4[%c8_47, %c0_48, %c0_49] : memref<9x32x1xf32, #tpu.memory_space<vmem>>, vector<1x32x1xf32>
    %91 = vector.shape_cast %90 : vector<1x32x1xf32> to vector<32x1xf32>
    %92 = vector.broadcast %91 : vector<32x1xf32> to vector<32x256xf32>
    %93 = arith.mulf %89, %92 : vector<32x256xf32>
    %94 = arith.addf %84, %93 : vector<32x256xf32>
    %c0_50 = arith.constant 0 : index
    %c0_51 = arith.constant 0 : index
    %95 = vector.load %arg5[%c0_50, %c0_51] : memref<32x1xf32, #tpu.memory_space<vmem>>, vector<32x1xf32>
    %96 = vector.broadcast %95 : vector<32x1xf32> to vector<32x256xf32>
    %97 = arith.addf %94, %96 : vector<32x256xf32>
    %cst_52 = arith.constant 0.000000e+00 : f32
    %98 = vector.broadcast %cst_52 : f32 to vector<32x256xf32>
    %99 = arith.maximumf %97, %98 : vector<32x256xf32>
    %c0_53 = arith.constant 0 : index
    %c0_54 = arith.constant 0 : index
    %100 = vector.load %arg6[%c0_53, %c0_54] : memref<16x32xf32, #tpu.memory_space<vmem>>, vector<16x32xf32>
    %cst_55 = arith.constant dense<0.000000e+00> : vector<16x256xf32>
    %101 = tpu.matmul %100, %99, %cst_55 {dimension_numbers = #tpu.dot_dimension_numbers<[1], [0], [0], [1], [0, 0, 1, 1], [], []>} : vector<16x32xf32>, vector<32x256xf32>, vector<16x256xf32> -> vector<16x256xf32>
    %c0_56 = arith.constant 0 : index
    %c0_57 = arith.constant 0 : index
    %102 = vector.load %arg7[%c0_56, %c0_57] : memref<16x1xf32, #tpu.memory_space<vmem>>, vector<16x1xf32>
    %103 = vector.broadcast %102 : vector<16x1xf32> to vector<16x256xf32>
    %104 = arith.addf %101, %103 : vector<16x256xf32>
    %105 = arith.addf %104, %10 : vector<16x256xf32>
    %c0_58 = arith.constant 0 : index
    %c0_59 = arith.constant 0 : index
    %c0_60 = arith.constant 0 : index
    %106 = vector.load %arg9[%c0_58, %c0_59, %c0_60] : memref<1x16x256xf32, #tpu.memory_space<vmem>>, vector<1x16x256xf32>
    %107 = vector.shape_cast %106 : vector<1x16x256xf32> to vector<16x256xf32>
    %108 = vector.shape_cast %105 : vector<16x256xf32> to vector<1x16x256xf32>
    tpu.vector_store %arg9[%c0_58, %c0_59, %c0_60], %108 {strides = array<i32>} : memref<1x16x256xf32, #tpu.memory_space<vmem>>, vector<1x16x256xf32>,
    return
  }
  func.func @transform_0(%arg0: i32) -> (i32, i32, i32) {
    %c0_i32 = arith.constant 0 : i32
    %c0_i32_0 = arith.constant 0 : i32
    %c0_i32_1 = arith.constant 0 : i32
    return %arg0, %c0_i32, %c0_i32_0 : i32, i32, i32
  }
  func.func @transform_1(%arg0: i32) -> (i32, i32) {
    %c0_i32 = arith.constant 0 : i32
    %c0_i32_0 = arith.constant 0 : i32
    %c0_i32_1 = arith.constant 0 : i32
    return %c0_i32, %c0_i32_0 : i32, i32
  }
  func.func @transform_2(%arg0: i32) -> (i32, i32) {
    %c0_i32 = arith.constant 0 : i32
    %c0_i32_0 = arith.constant 0 : i32
    %c0_i32_1 = arith.constant 0 : i32
    return %c0_i32, %c0_i32_0 : i32, i32
  }
  func.func @transform_3(%arg0: i32) -> (i32, i32, i32) {
    %c0_i32 = arith.constant 0 : i32
    %c0_i32_0 = arith.constant 0 : i32
    %c0_i32_1 = arith.constant 0 : i32
    %c0_i32_2 = arith.constant 0 : i32
    return %c0_i32, %c0_i32_0, %c0_i32_1 : i32, i32, i32
  }
  func.func @transform_4(%arg0: i32) -> (i32, i32) {
    %c0_i32 = arith.constant 0 : i32
    %c0_i32_0 = arith.constant 0 : i32
    %c0_i32_1 = arith.constant 0 : i32
    return %c0_i32, %c0_i32_0 : i32, i32
  }
  func.func @transform_5(%arg0: i32) -> (i32, i32) {
    %c0_i32 = arith.constant 0 : i32
    %c0_i32_0 = arith.constant 0 : i32
    %c0_i32_1 = arith.constant 0 : i32
    return %c0_i32, %c0_i32_0 : i32, i32
  }
  func.func @transform_6(%arg0: i32) -> (i32, i32) {
    %c0_i32 = arith.constant 0 : i32
    %c0_i32_0 = arith.constant 0 : i32
    %c0_i32_1 = arith.constant 0 : i32
    return %c0_i32, %c0_i32_0 : i32, i32
  }
  func.func @transform_7(%arg0: i32) -> (i32, i32, i32) {
    %c0_i32 = arith.constant 0 : i32
    %c0_i32_0 = arith.constant 0 : i32
    %c0_i32_1 = arith.constant 0 : i32
    %c0_i32_2 = arith.constant 0 : i32
    return %c0_i32, %c0_i32_0, %c0_i32_1 : i32, i32, i32
  }
  func.func @transform_8(%arg0: i32) -> (i32, i32, i32) {
    %c0_i32 = arith.constant 0 : i32
    %c0_i32_0 = arith.constant 0 : i32
    %c0_i32_1 = arith.constant 0 : i32
    return %arg0, %c0_i32, %c0_i32_0 : i32, i32, i32
  }
}

</mosaic_0001>

<llo_original>
// kernel: tpu_custom_call.1
$region0: #{tpu_custom_call.1}
  #allocation0 [shape = 'u32[]', space=smem, size = 0x4, offset = 0x4, fixed_abs, tag = 'smem constant byte address 0x4 - core index']
  #allocation1 [shape = 'u32[144,128]{1,0:T(1,128)}', space=vmem, size = 0x12000, scoped, tag = 'internal scratch']
  %s0 = inlined_call_operand.vmem [shape: f32[2,8,256], index: 0, kind: input, shape index: {}]
  %s1 = inlined_call_operand.vmem [shape: f32[48,8], index: 1, kind: input, shape index: {}]
  %s2 = inlined_call_operand.vmem [shape: f32[48,1], index: 2, kind: input, shape index: {}]
  %s3 = inlined_call_operand.vmem [shape: f32[9,32,1], index: 3, kind: input, shape index: {}]
  %s4 = inlined_call_operand.vmem [shape: f32[32,1], index: 4, kind: input, shape index: {}]
  %s5 = inlined_call_operand.vmem [shape: f32[16,32], index: 5, kind: input, shape index: {}]
  %s6 = inlined_call_operand.vmem [shape: f32[16,1], index: 6, kind: input, shape index: {}]
  %s7 = inlined_call_operand.vmem [shape: f32[9,1,256], index: 7, kind: input, shape index: {}]
  %s8 = inlined_call_operand.hbm [shape: f32[2,16,256], index: 8, kind: output, shape index: {}]
  %s9 = sld [smem:[#allocation0]]
  $region65: #{tpu_custom_call.1} parent=0
    _
  %s11 = ssub.s32 1, %s9
  %s12 = scalar_select 0, %s11, %s9
  $region1: #{tpu_custom_call.1} parent=0
    #allocation2 [shape = 'u8[32768]{0}', space=vmem, size = 0x8000, scoped, tag = 'output window, operand 0']
    #allocation3 [shape = 's32[2]{0}', space=sflag, size = 0x8, scoped, tag = 'scoped memory for tpu_custom_call.1']
    %13 = vsyncpa [#allocation3], 0
    %s14 = scalar_lea.sflag [#allocation3], 1
    %15 = vsyncpa %s14, 0
    loop: start=0, step=1, limit=4
    $region2: #{tpu_custom_call.1} parent=1 // loop_pre_header
      _
    $region3: #{tpu_custom_call.1} parent=1 // loop_header
      %s17 = sphi 0, %s21
      %p18 = scmp.ge.s32.totalorder %s17, 4
      %s27 = sphi 0, %s29
      %s30 = sphi 0, %s27
      %s31 = sphi 0, %s30
      %s47 = sphi 0, %s31
      %s51 = sphi 0, %s51
      %s53 = sphi 0, %s51
      %s54 = sphi 0, %s53
      %s68 = sphi 0, %s54
      %s72 = sphi 0, %s72
      %s74 = sphi 0, %s72
      %s75 = sphi 0, %s74
      %s89 = sphi 0, %s75
      %s93 = sphi 0, %s93
      %s95 = sphi 0, %s93
      %s96 = sphi 0, %s95
      %s110 = sphi 0, %s96
      %s114 = sphi 0, %s114
      %s116 = sphi 0, %s114
      %s117 = sphi 0, %s116
      %s131 = sphi 0, %s117
      %s135 = sphi 0, %s135
      %s137 = sphi 0, %s135
      %s138 = sphi 0, %s137
      %s152 = sphi 0, %s138
      %s156 = sphi 0, %s156
      %s158 = sphi 0, %s156
      %s159 = sphi 0, %s158
      %s173 = sphi 0, %s159
      %s177 = sphi 0, %s177
      %s179 = sphi 0, %s177
      %s180 = sphi 0, %s179
      %s194 = sphi 0, %s180
      %s200 = sphi 0, %s202
      %s203 = sphi 0, %s200
      %s204 = sphi 0, %s203
      %s220 = sphi 0, %s204
    $region4: #{tpu_custom_call.1} parent=1 // loop_header_branch
      %20 = sbr.rel (%p18) target = $region8
    $region5: #{tpu_custom_call.1} parent=1 // loop_body
      %s22 = ssub.s32 %s17, 1
      %s23 = ssub.s32 %s17, 2
      %s24 = sadd.s32 %s17, 1
      %s25 = ssub.s32 %s17, %s24
      %p26 = scmp.eq.s32.totalorder %s25, 0
      %s28 = sadd.s32 %s27, 1
      %s29 = scalar_select %p26, %s27, %s28
      %p32 = pneg %p26
      %p33 = scmp.eq.s32.totalorder %s17, 1
      %p34 = por %p32, %p33
      %p35 = scmp.ne.s32.totalorder %s27, %s30
      %p36 = scmp.eq.s32.totalorder %s17, 0
      %p37 = por %p35, %p36
      %p38 = scmp.ne.s32.totalorder %s27, %s30
      %p39 = scmp.eq.s32.totalorder %s22, 1
      %p40 = por %p38, %p39
      %p41 = scmp.ne.s32.totalorder %s30, %s31
      %p42 = scmp.eq.s32.totalorder %s22, 0
      %p43 = por %p41, %p42
      %p44 = scmp.ne.s32.totalorder %s30, %s31
      %p45 = scmp.eq.s32.totalorder %s23, 1
      %p46 = por %p44, %p45
      %p48 = scmp.ne.s32.totalorder %s31, %s47
      %p49 = scmp.eq.s32.totalorder %s23, 0
      %p50 = por %p48, %p49
      %s52 = sadd.s32 %s51, 1
      %p55 = scmp.eq.s32.totalorder %s17, 1
      %p56 = scmp.ne.s32.totalorder %s51, %s53
      %p57 = scmp.eq.s32.totalorder %s17, 0
      %p58 = por %p56, %p57
      %p59 = scmp.ne.s32.totalorder %s51, %s53
      %p60 = scmp.eq.s32.totalorder %s22, 1
      %p61 = por %p59, %p60
      %p62 = scmp.ne.s32.totalorder %s53, %s54
      %p63 = scmp.eq.s32.totalorder %s22, 0
      %p64 = por %p62, %p63
      %p65 = scmp.ne.s32.totalorder %s53, %s54
      %p66 = scmp.eq.s32.totalorder %s23, 1
      %p67 = por %p65, %p66
      %p69 = scmp.ne.s32.totalorder %s54, %s68
      %p70 = scmp.eq.s32.totalorder %s23, 0
      %p71 = por %p69, %p70
      %s73 = sadd.s32 %s72, 1
      %p76 = scmp.eq.s32.totalorder %s17, 1
      %p77 = scmp.ne.s32.totalorder %s72, %s74
      %p78 = scmp.eq.s32.totalorder %s17, 0
      %p79 = por %p77, %p78
      %p80 = scmp.ne.s32.totalorder %s72, %s74
      %p81 = scmp.eq.s32.totalorder %s22, 1
      %p82 = por %p80, %p81
      %p83 = scmp.ne.s32.totalorder %s74, %s75
      %p84 = scmp.eq.s32.totalorder %s22, 0
      %p85 = por %p83, %p84
      %p86 = scmp.ne.s32.totalorder %s74, %s75
      %p87 = scmp.eq.s32.totalorder %s23, 1
      %p88 = por %p86, %p87
      %p90 = scmp.ne.s32.totalorder %s75, %s89
      %p91 = scmp.eq.s32.totalorder %s23, 0
      %p92 = por %p90, %p91
      %s94 = sadd.s32 %s93, 1
      %p97 = scmp.eq.s32.totalorder %s17, 1
      %p98 = scmp.ne.s32.totalorder %s93, %s95
      %p99 = scmp.eq.s32.totalorder %s17, 0
      %p100 = por %p98, %p99
      %p101 = scmp.ne.s32.totalorder %s93, %s95
      %p102 = scmp.eq.s32.totalorder %s22, 1
      %p103 = por %p101, %p102
      %p104 = scmp.ne.s32.totalorder %s95, %s96
      %p105 = scmp.eq.s32.totalorder %s22, 0
      %p106 = por %p104, %p105
      %p107 = scmp.ne.s32.totalorder %s95, %s96
      %p108 = scmp.eq.s32.totalorder %s23, 1
      %p109 = por %p107, %p108
      %p111 = scmp.ne.s32.totalorder %s96, %s110
      %p112 = scmp.eq.s32.totalorder %s23, 0
      %p113 = por %p111, %p112
      %s115 = sadd.s32 %s114, 1
      %p118 = scmp.eq.s32.totalorder %s17, 1
      %p119 = scmp.ne.s32.totalorder %s114, %s116
      %p120 = scmp.eq.s32.totalorder %s17, 0
      %p121 = por %p119, %p120
      %p122 = scmp.ne.s32.totalorder %s114, %s116
      %p123 = scmp.eq.s32.totalorder %s22, 1
      %p124 = por %p122, %p123
      %p125 = scmp.ne.s32.totalorder %s116, %s117
      %p126 = scmp.eq.s32.totalorder %s22, 0
      %p127 = por %p125, %p126
      %p128 = scmp.ne.s32.totalorder %s116, %s117
      %p129 = scmp.eq.s32.totalorder %s23, 1
      %p130 = por %p128, %p129
      %p132 = scmp.ne.s32.totalorder %s117, %s131
      %p133 = scmp.eq.s32.totalorder %s23, 0
      %p134 = por %p132, %p133
      %s136 = sadd.s32 %s135, 1
      %p139 = scmp.eq.s32.totalorder %s17, 1
      %p140 = scmp.ne.s32.totalorder %s135, %s137
      %p141 = scmp.eq.s32.totalorder %s17, 0
      %p142 = por %p140, %p141
      %p143 = scmp.ne.s32.totalorder %s135, %s137
      %p144 = scmp.eq.s32.totalorder %s22, 1
      %p145 = por %p143, %p144
      %p146 = scmp.ne.s32.totalorder %s137, %s138
      %p147 = scmp.eq.s32.totalorder %s22, 0
      %p148 = por %p146, %p147
      %p149 = scmp.ne.s32.totalorder %s137, %s138
      %p150 = scmp.eq.s32.totalorder %s23, 1
      %p151 = por %p149, %p150
      %p153 = scmp.ne.s32.totalorder %s138, %s152
      %p154 = scmp.eq.s32.totalorder %s23, 0
      %p155 = por %p153, %p154
      %s157 = sadd.s32 %s156, 1
      %p160 = scmp.eq.s32.totalorder %s17, 1
      %p161 = scmp.ne.s32.totalorder %s156, %s158
      %p162 = scmp.eq.s32.totalorder %s17, 0
      %p163 = por %p161, %p162
      %p164 = scmp.ne.s32.totalorder %s156, %s158
      %p165 = scmp.eq.s32.totalorder %s22, 1
      %p166 = por %p164, %p165
      %p167 = scmp.ne.s32.totalorder %s158, %s159
      %p168 = scmp.eq.s32.totalorder %s22, 0
      %p169 = por %p167, %p168
      %p170 = scmp.ne.s32.totalorder %s158, %s159
      %p171 = scmp.eq.s32.totalorder %s23, 1
      %p172 = por %p170, %p171
      %p174 = scmp.ne.s32.totalorder %s159, %s173
      %p175 = scmp.eq.s32.totalorder %s23, 0
      %p176 = por %p174, %p175
      %s178 = sadd.s32 %s177, 1
      %p181 = scmp.eq.s32.totalorder %s17, 1
      %p182 = scmp.ne.s32.totalorder %s177, %s179
      %p183 = scmp.eq.s32.totalorder %s17, 0
      %p184 = por %p182, %p183
      %p185 = scmp.ne.s32.totalorder %s177, %s179
      %p186 = scmp.eq.s32.totalorder %s22, 1
      %p187 = por %p185, %p186
      %p188 = scmp.ne.s32.totalorder %s179, %s180
      %p189 = scmp.eq.s32.totalorder %s22, 0
      %p190 = por %p188, %p189
      %p191 = scmp.ne.s32.totalorder %s179, %s180
      %p192 = scmp.eq.s32.totalorder %s23, 1
      %p193 = por %p191, %p192
      %p195 = scmp.ne.s32.totalorder %s180, %s194
      %p196 = scmp.eq.s32.totalorder %s23, 0
      %p197 = por %p195, %p196
      %s198 = ssub.s32 %s17, %s24
      %p199 = scmp.eq.s32.totalorder %s198, 0
      %s201 = sadd.s32 %s200, 1
      %s202 = scalar_select %p199, %s200, %s201
      %p205 = pneg %p199
      %p206 = scmp.eq.s32.totalorder %s17, 1
      %p207 = por %p205, %p206
      %p208 = scmp.ne.s32.totalorder %s200, %s203
      %p209 = scmp.eq.s32.totalorder %s17, 0
      %p210 = por %p208, %p209
      %p211 = scmp.ne.s32.totalorder %s200, %s203
      %p212 = scmp.eq.s32.totalorder %s22, 1
      %p213 = por %p211, %p212
      %p214 = scmp.ne.s32.totalorder %s203, %s204
      %p215 = scmp.eq.s32.totalorder %s22, 0
      %p216 = por %p214, %p215
      %p217 = scmp.ne.s32.totalorder %s203, %s204
      %p218 = scmp.eq.s32.totalorder %s23, 1
      %p219 = por %p217, %p218
      %p221 = scmp.ne.s32.totalorder %s204, %s220
      %p222 = scmp.eq.s32.totalorder %s23, 0
      %p223 = por %p221, %p222
      %p224 = scmp.le.s32.totalorder 1, %s17
      %p225 = scmp.lt.s32.totalorder %s17, 3
      %p226 = pnand %p224, %p225
      %p227 = pneg %p226
      // Predicated region
      $region9: #{tpu_custom_call.1} parent=5 // pred_check
        _
      $region10: #{tpu_custom_call.1} parent=5 // pred_check_branch
        %229 = sbr.rel (%p226) target = $region12
      $region11: #{tpu_custom_call.1} parent=5 // pred_region
        %s230 = ssub.s32 %s17, 1
        // Predicated region
        $region13: #{tpu_custom_call.1} parent=11 // pred_check
          %p231 = pneg %p64
        $region14: #{tpu_custom_call.1} parent=11 // pred_check_branch
          %233 = sbr.rel (%p231) target = $region16
        $region15: #{tpu_custom_call.1} parent=11 // pred_region
          _
        $region16: #{tpu_custom_call.1} parent=11 // pred_fallthru
          _
        // Predicated region
        $region17: #{tpu_custom_call.1} parent=11 // pred_check
          %p234 = pneg %p85
        $region18: #{tpu_custom_call.1} parent=11 // pred_check_branch
          %236 = sbr.rel (%p234) target = $region20
        $region19: #{tpu_custom_call.1} parent=11 // pred_region
          _
        $region20: #{tpu_custom_call.1} parent=11 // pred_fallthru
          _
        // Predicated region
        $region21: #{tpu_custom_call.1} parent=11 // pred_check
          %p237 = pneg %p106
        $region22: #{tpu_custom_call.1} parent=11 // pred_check_branch
          %239 = sbr.rel (%p237) target = $region24
        $region23: #{tpu_custom_call.1} parent=11 // pred_region
          _
        $region24: #{tpu_custom_call.1} parent=11 // pred_fallthru
          _
        // Predicated region
        $region25: #{tpu_custom_call.1} parent=11 // pred_check
          %p240 = pneg %p127
        $region26: #{tpu_custom_call.1} parent=11 // pred_check_branch
          %242 = sbr.rel (%p240) target = $region28
        $region27: #{tpu_custom_call.1} parent=11 // pred_region
          _
        $region28: #{tpu_custom_call.1} parent=11 // pred_fallthru
          _
        // Predicated region
        $region29: #{tpu_custom_call.1} parent=11 // pred_check
          %p243 = pneg %p148
        $region30: #{tpu_custom_call.1} parent=11 // pred_check_branch
          %245 = sbr.rel (%p243) target = $region32
        $region31: #{tpu_custom_call.1} parent=11 // pred_region
          _
        $region32: #{tpu_custom_call.1} parent=11 // pred_fallthru
          _
        // Predicated region
        $region33: #{tpu_custom_call.1} parent=11 // pred_check
          %p246 = pneg %p169
        $region34: #{tpu_custom_call.1} parent=11 // pred_check_branch
          %248 = sbr.rel (%p246) target = $region36
        $region35: #{tpu_custom_call.1} parent=11 // pred_region
          _
        $region36: #{tpu_custom_call.1} parent=11 // pred_fallthru
          _
        // Predicated region
        $region37: #{tpu_custom_call.1} parent=11 // pred_check
          %p249 = pneg %p190
        $region38: #{tpu_custom_call.1} parent=11 // pred_check_branch
          %251 = sbr.rel (%p249) target = $region40
        $region39: #{tpu_custom_call.1} parent=11 // pred_region
          _
        $region40: #{tpu_custom_call.1} parent=11 // pred_fallthru
          _
      $region12: #{tpu_custom_call.1} parent=5 // pred_fallthru
        _
      %p252 = scmp.lt.s32.totalorder %s17, 2
      // Predicated region
      $region41: #{tpu_custom_call.1} parent=5 // pred_check
        %p253 = pneg %p252
      $region42: #{tpu_custom_call.1} parent=5 // pred_check_branch
        %255 = sbr.rel (%p253) target = $region44
      $region43: #{tpu_custom_call.1} parent=5 // pred_region
        // Predicated region
        $region45: #{tpu_custom_call.1} parent=43 // pred_check
          %p256 = pneg %p37
        $region46: #{tpu_custom_call.1} parent=43 // pred_check_branch
          %258 = sbr.rel (%p256) target = $region48
        $region47: #{tpu_custom_call.1} parent=43 // pred_region
          %p259 = scmp.lt.s32.totalorder %s17, 1
          %s260 = scalar_select %p259, %s17, 1
          %s261 = smul.addr %s260, 2
          %s262 = smul.addr %s261, 8
          %s263 = scalar_lea.vmem %s0, %s262
        $region48: #{tpu_custom_call.1} parent=43 // pred_fallthru
          _
      $region44: #{tpu_custom_call.1} parent=5 // pred_fallthru
        _
      %p264 = scmp.le.s32.totalorder 1, %s17
      %p265 = scmp.lt.s32.totalorder %s17, 3
      %p266 = pnand %p264, %p265
      %p267 = pneg %p266
      // Predicated region
      $region49: #{tpu_custom_call.1} parent=5 // pred_check
        _
      $region50: #{tpu_custom_call.1} parent=5 // pred_check_branch
        %269 = sbr.rel (%p266) target = $region52
      $region51: #{tpu_custom_call.1} parent=5 // pred_region
        %s270 = ssub.s32 %s17, 1
        %p271 = scmp.lt.s32.totalorder %s22, 1
        %s272 = scalar_select %p271, %s22, 1
        %s273 = smul.addr %s272, 2
        %s274 = smul.addr %s273, 8
        %s275 = scalar_lea.vmem %s0, %s274
        %p276 = pneg %p43
        %p277 = pneg %p40
        %p278 = pneg %p64
        %p279 = pneg %p61
        %p280 = pneg %p85
        %p281 = pneg %p82
        %p282 = pneg %p106
        %p283 = pneg %p103
        %p284 = pneg %p127
        %p285 = pneg %p124
        %p286 = pneg %p148
        %p287 = pneg %p145
        %p288 = pneg %p169
        %p289 = pneg %p166
        %p290 = pneg %p190
        %p291 = pneg %p187
        %p292 = pneg %p216
        %p293 = pneg %p213
        %s294 = sand.u32 %s203, 1
        %s295 = scalar_lea.sflag [#allocation3], %s294
        %s296 = sand.u32 %s203, 1
        %s297 = smul.addr %s296, 32
        %s298 = scalar_lea.vmem [#allocation2], %s297
        %p299 = scmp.lt.s32.totalorder %s22, 1
        %s300 = scalar_select %p299, %s22, 1
        %s301 = smul.addr %s300, 2
        %s302 = smul.addr %s301, 8
        %s303 = scalar_lea.vmem %s0, %s302
        %v304 = vld [vmem:[%s303] sm:$0xff]
        %v305 = vld [vmem:[%s303 + $0x8] sm:$0xff]
        %v306 = vld [vmem:[%s1] sm:$0xff]
        %v307 = vld [vmem:[%s1 + $0x8] sm:$0xff]
        %v308 = vld [vmem:[%s1 + $0x10] sm:$0xff]
        %v309 = vld [vmem:[%s1 + $0x18] sm:$0xff]
        %v310 = vld [vmem:[%s1 + $0x20] sm:$0xff]
        %v311 = vld [vmem:[%s1 + $0x28] sm:$0xff]
        %v312 = vld [vmem:[%s2] sm:$0xff]
        %v313 = vld [vmem:[%s2 + $0x8] sm:$0xff]
        %v314 = vld [vmem:[%s2 + $0x10] sm:$0xff]
        %v315 = vld [vmem:[%s2 + $0x18] sm:$0xff]
        %v316 = vld [vmem:[%s2 + $0x20] sm:$0xff]
        %v317 = vld [vmem:[%s2 + $0x28] sm:$0xff]
        %319 = vset.pattern.permute.xlu0 0
        %320 = vperm.xlu0 %319, %v312
        %v321 = vpop.permute.xlu0 %320
        %324 = vset.pattern.permute.xlu0 0
        %325 = vperm.xlu0 %324, %v313
        %v326 = vpop.permute.xlu0 %325
        %329 = vset.pattern.permute.xlu0 0
        %330 = vperm.xlu0 %329, %v314
        %v331 = vpop.permute.xlu0 %330
        %334 = vset.pattern.permute.xlu0 0
        %335 = vperm.xlu0 %334, %v315
        %v336 = vpop.permute.xlu0 %335
        %339 = vset.pattern.permute.xlu0 0
        %340 = vperm.xlu0 %339, %v316
        %v341 = vpop.permute.xlu0 %340
        %344 = vset.pattern.permute.xlu0 0
        %345 = vperm.xlu0 %344, %v317
        %v346 = vpop.permute.xlu0 %345
        %vm348 = vcmask 64512
        %v350 = vsel %vm348, %v306, 0
        %v353 = vsel %vm348, %v307, 0
        %v356 = vsel %vm348, %v308, 0
        %v359 = vsel %vm348, %v309, 0
        %v362 = vsel %vm348, %v310, 0
        %v365 = vsel %vm348, %v311, 0
        %367 = vmatprep.subr.mxu0 %v305
        %368 = vmatpush1.msra.mxu0 %v304
        %369 = vmatprep.subr.mxu0 0.0
        %370 = vmatpush1.msra.mxu0 0.0
        %371 = vmatprep.subr.mxu0 0.0
        %372 = vmatpush1.msra.mxu0 0.0
        %373 = vmatprep.subr.mxu0 0.0
        %374 = vmatpush1.msra.mxu0 0.0
        %375 = vmatprep.subr.mxu0 0.0
        %376 = vmatpush1.msra.mxu0 0.0
        %377 = vmatprep.subr.mxu0 0.0
        %378 = vmatpush1.msra.mxu0 0.0
        %379 = vmatprep.subr.mxu0 0.0
        %380 = vmatpush1.msra.mxu0 0.0
        %381 = vmatprep.subr.mxu0 0.0
        %382 = vmatpush1.msra.mxu0 0.0
        %383 = vmatprep.subr.mxu0 0.0
        %384 = vmatpush1.msra.mxu0 0.0
        %385 = vmatprep.subr.mxu0 0.0
        %386 = vmatpush1.msra.mxu0 0.0
        %387 = vmatprep.subr.mxu0 0.0
        %388 = vmatpush1.msra.mxu0 0.0
        %389 = vmatprep.subr.mxu0 0.0
        %390 = vmatpush1.msra.mxu0 0.0
        %391 = vmatprep.subr.mxu0 0.0
        %392 = vmatpush1.msra.mxu0 0.0
        %393 = vmatprep.subr.mxu0 0.0
        %394 = vmatpush1.msra.mxu0 0.0
        %395 = vmatprep.subr.mxu0 0.0
        %396 = vmatpush1.msra.mxu0 0.0
        %397 = vmatprep.subr.mxu0 0.0
        %398 = vmatpush1.msra.mxu0 0.0
        %399 = vmatprep.subr.mxu0 0.0
        %400 = vmatpush1.msra.mxu0 0.0
        %401 = vmatprep.subr.mxu0 0.0
        %402 = vmatpush1.msra.mxu0 0.0
        %403 = vmatprep.subr.mxu0 0.0
        %404 = vmatpush1.msra.mxu0 0.0
        %405 = vmatprep.subr.mxu0 0.0
        %406 = vmatpush1.msra.mxu0 0.0
        %407 = vmatprep.subr.mxu0 0.0
        %408 = vmatpush1.msra.mxu0 0.0
        %409 = vmatprep.subr.mxu0 0.0
        %410 = vmatpush1.msra.mxu0 0.0
        %411 = vmatprep.subr.mxu0 0.0
        %412 = vmatpush1.msra.mxu0 0.0
        %413 = vmatprep.subr.mxu0 0.0
        %414 = vmatpush1.msra.mxu0 0.0
        %415 = vmatprep.subr.mxu0 0.0
        %416 = vmatpush1.msra.mxu0 0.0
        %417 = vmatprep.subr.mxu0 0.0
        %418 = vmatpush1.msra.mxu0 0.0
        %419 = vmatprep.subr.mxu0 0.0
        %420 = vmatpush1.msra.mxu0 0.0
        %421 = vmatprep.subr.mxu0 0.0
        %422 = vmatpush1.msra.mxu0 0.0
        %423 = vmatprep.subr.mxu0 0.0
        %424 = vmatpush1.msra.mxu0 0.0
        %425 = vmatprep.subr.mxu0 0.0
        %426 = vmatpush1.msra.mxu0 0.0
        %427 = vmatprep.subr.mxu0 0.0
        %428 = vmatpush1.msra.mxu0 0.0
        %429 = vmatprep.subr.mxu0 0.0
        %430 = vmatpush1.msra.mxu0 0.0
        %431 = vmatprep.mubr.f32.mxu0 0.0
        %432 = vmatmul.mubr.f32.gmra.mrb[0].mxu0 %v350
        %v433 = vpop.f32.mrb[0].mxu0
        %v434 = vadd.f32 %v321, %v433
        %v435 = vpop.f32.mrb[0].mxu0
        %v436 = vadd.f32 %v321, %v435
        %437 = vmatprep.mubr.f32.mxu0 0.0
        %438 = vmatmul.mubr.f32.gmra.mrb[0].mxu0 %v353
        %v439 = vpop.f32.mrb[0].mxu0
        %v440 = vadd.f32 %v326, %v439
        %v441 = vpop.f32.mrb[0].mxu0
        %v442 = vadd.f32 %v326, %v441
        %443 = vmatprep.mubr.f32.mxu0 0.0
        %444 = vmatmul.mubr.f32.gmra.mrb[0].mxu0 %v356
        %v445 = vpop.f32.mrb[0].mxu0
        %v446 = vadd.f32 %v331, %v445
        %v447 = vpop.f32.mrb[0].mxu0
        %v448 = vadd.f32 %v331, %v447
        %449 = vmatprep.mubr.f32.mxu0 0.0
        %450 = vmatmul.mubr.f32.gmra.mrb[0].mxu0 %v359
        %v451 = vpop.f32.mrb[0].mxu0
        %v452 = vadd.f32 %v336, %v451
        %v453 = vpop.f32.mrb[0].mxu0
        %v454 = vadd.f32 %v336, %v453
        %455 = vmatprep.mubr.f32.mxu0 0.0
        %456 = vmatmul.mubr.f32.gmra.mrb[0].mxu0 %v362
        %v457 = vpop.f32.mrb[0].mxu0
        %v458 = vadd.f32 %v341, %v457
        %v459 = vpop.f32.mrb[0].mxu0
        %v460 = vadd.f32 %v341, %v459
        %461 = vmatprep.mubr.f32.mxu0 0.0
        %462 = vmatmul.mubr.f32.gmra.mrb[0].mxu0 %v365
        %v463 = vpop.f32.mrb[0].mxu0
        %v464 = vadd.f32 %v346, %v463
        %v465 = vpop.f32.mrb[0].mxu0
        %v466 = vadd.f32 %v346, %v465
        %467 = vdwg.mxu0
        %v468 = vmax.f32 %v434, 0.0
        %v469 = vmax.f32 %v436, 0.0
        %v470 = vmax.f32 %v440, 0.0
        %v471 = vmax.f32 %v442, 0.0
        %v472 = vmax.f32 %v446, 0.0
        %v473 = vmax.f32 %v448, 0.0
        %v474 = vmax.f32 %v452, 0.0
        %v475 = vmax.f32 %v454, 0.0
        %s476 = scalar_lea.vmem %s3, 128
        %v477 = vld [vmem:[%s476] sm:$0xff]
        %v478 = vld [vmem:[%s476 + $0x8] sm:$0xff]
        %v479 = vld [vmem:[%s476 + $0x10] sm:$0xff]
        %v480 = vld [vmem:[%s476 + $0x18] sm:$0xff]
        %482 = vset.pattern.permute.xlu0 0
        %483 = vperm.xlu0 %482, %v477
        %v484 = vpop.permute.xlu0 %483
        %487 = vset.pattern.permute.xlu0 0
        %488 = vperm.xlu0 %487, %v478
        %v489 = vpop.permute.xlu0 %488
        %492 = vset.pattern.permute.xlu0 0
        %493 = vperm.xlu0 %492, %v479
        %v494 = vpop.permute.xlu0 %493
        %497 = vset.pattern.permute.xlu0 0
        %498 = vperm.xlu0 %497, %v480
        %v499 = vpop.permute.xlu0 %498
        %v501 = vmul.f32 %v468, %v484
        %v502 = vmul.f32 %v469, %v484
        %v503 = vmul.f32 %v470, %v489
        %v504 = vmul.f32 %v471, %v489
        %v505 = vmul.f32 %v472, %v494
        %v506 = vmul.f32 %v473, %v494
        %v507 = vmul.f32 %v474, %v499
        %v508 = vmul.f32 %v475, %v499
        %509 = vrot.lane.b32.xlu0 %v468, 9
        %v510 = vpop.permute.xlu0 %509
        %511 = vrot.lane.b32.xlu0 %v470, 9
        %v512 = vpop.permute.xlu0 %511
        %513 = vrot.lane.b32.xlu0 %v472, 9
        %v514 = vpop.permute.xlu0 %513
        %515 = vrot.lane.b32.xlu0 %v474, 9
        %v516 = vpop.permute.xlu0 %515
        %517 = vrot.lane.b32.xlu0 %v469, 9
        %v518 = vpop.permute.xlu0 %517
        %519 = vrot.lane.b32.xlu0 %v471, 9
        %v520 = vpop.permute.xlu0 %519
        %521 = vrot.lane.b32.xlu0 %v473, 9
        %v522 = vpop.permute.xlu0 %521
        %523 = vrot.lane.b32.xlu0 %v475, 9
        %v524 = vpop.permute.xlu0 %523
        %v525 = vlaneseq
        %v526 = vand.u32 %v525, 127
        %vm527 = vcmp.lt.s32.totalorder %v526, 9
        %v528 = vsel %vm527, %v510, %v518
        %v529 = vsel %vm527, %v512, %v520
        %v530 = vsel %vm527, %v514, %v522
        %v531 = vsel %vm527, %v516, %v524
        %v532 = vsel %vm527, %v518, %v510
        %v533 = vsel %vm527, %v520, %v512
        %v534 = vsel %vm527, %v522, %v514
        %v535 = vsel %vm527, %v524, %v516
        %v536 = vld [vmem:[%s7] sm:$0x3]
        %v538 = vlaneseq
        %v539 = vshrl.u32 %v538, 7
        %v540 = vsub.s32 0, %v539
        %v541 = vrot.slane %v536, %v540
        %v542 = vlaneseq
        %v543 = vshrl.u32 %v542, 7
        %v544 = vsub.s32 1, %v543
        %v545 = vrot.slane %v536, %v544
        %v548 = vmul.f32 %v532, %v541
        %v549 = vmul.f32 %v528, %v545
        %v550 = vmul.f32 %v533, %v541
        %v551 = vmul.f32 %v529, %v545
        %v552 = vmul.f32 %v534, %v541
        %v553 = vmul.f32 %v530, %v545
        %v554 = vmul.f32 %v535, %v541
        %v555 = vmul.f32 %v531, %v545
        %v556 = vld [vmem:[%s3] sm:$0xff]
        %v557 = vld [vmem:[%s3 + $0x8] sm:$0xff]
        %v558 = vld [vmem:[%s3 + $0x10] sm:$0xff]
        %v559 = vld [vmem:[%s3 + $0x18] sm:$0xff]
        %561 = vset.pattern.permute.xlu0 0
        %562 = vperm.xlu0 %561, %v556
        %v563 = vpop.permute.xlu0 %562
        %566 = vset.pattern.permute.xlu0 0
        %567 = vperm.xlu0 %566, %v557
        %v568 = vpop.permute.xlu0 %567
        %571 = vset.pattern.permute.xlu0 0
        %572 = vperm.xlu0 %571, %v558
        %v573 = vpop.permute.xlu0 %572
        %576 = vset.pattern.permute.xlu0 0
        %577 = vperm.xlu0 %576, %v559
        %v578 = vpop.permute.xlu0 %577
        %v580 = vmul.f32 %v548, %v563
        %v581 = vmul.f32 %v549, %v563
        %v582 = vmul.f32 %v550, %v568
        %v583 = vmul.f32 %v551, %v568
        %v584 = vmul.f32 %v552, %v573
        %v585 = vmul.f32 %v553, %v573
        %v586 = vmul.f32 %v554, %v578
        %v587 = vmul.f32 %v555, %v578
        %v588 = vadd.f32 %v501, %v580
        %v589 = vadd.f32 %v502, %v581
        %v590 = vadd.f32 %v503, %v582
        %v591 = vadd.f32 %v504, %v583
        %v592 = vadd.f32 %v505, %v584
        %v593 = vadd.f32 %v506, %v585
        %v594 = vadd.f32 %v507, %v586
        %v595 = vadd.f32 %v508, %v587
        %596 = vrot.lane.b32.xlu0 %v468, 8
        %v597 = vpop.permute.xlu0 %596
        %598 = vrot.lane.b32.xlu0 %v470, 8
        %v599 = vpop.permute.xlu0 %598
        %600 = vrot.lane.b32.xlu0 %v472, 8
        %v601 = vpop.permute.xlu0 %600
        %602 = vrot.lane.b32.xlu0 %v474, 8
        %v603 = vpop.permute.xlu0 %602
        %604 = vrot.lane.b32.xlu0 %v469, 8
        %v605 = vpop.permute.xlu0 %604
        %606 = vrot.lane.b32.xlu0 %v471, 8
        %v607 = vpop.permute.xlu0 %606
        %608 = vrot.lane.b32.xlu0 %v473, 8
        %v609 = vpop.permute.xlu0 %608
        %610 = vrot.lane.b32.xlu0 %v475, 8
        %v611 = vpop.permute.xlu0 %610
        %vm612 = vcmp.lt.s32.totalorder %v526, 8
        %v613 = vsel %vm612, %v597, %v605
        %v614 = vsel %vm612, %v599, %v607
        %v615 = vsel %vm612, %v601, %v609
        %v616 = vsel %vm612, %v603, %v611
        %v617 = vsel %vm612, %v605, %v597
        %v618 = vsel %vm612, %v607, %v599
        %v619 = vsel %vm612, %v609, %v601
        %v620 = vsel %vm612, %v611, %v603
        %s621 = scalar_lea.vmem %s7, 2
        %v622 = vld [vmem:[%s621] sm:$0x3]
        %v624 = vlaneseq
        %v625 = vshrl.u32 %v624, 7
        %v626 = vsub.s32 0, %v625
        %v627 = vrot.slane %v622, %v626
        %v628 = vlaneseq
        %v629 = vshrl.u32 %v628, 7
        %v630 = vsub.s32 1, %v629
        %v631 = vrot.slane %v622, %v630
        %v634 = vmul.f32 %v617, %v627
        %v635 = vmul.f32 %v613, %v631
        %v636 = vmul.f32 %v618, %v627
        %v637 = vmul.f32 %v614, %v631
        %v638 = vmul.f32 %v619, %v627
        %v639 = vmul.f32 %v615, %v631
        %v640 = vmul.f32 %v620, %v627
        %v641 = vmul.f32 %v616, %v631
        %s642 = scalar_lea.vmem %s3, 32
        %v643 = vld [vmem:[%s642] sm:$0xff]
        %v644 = vld [vmem:[%s642 + $0x8] sm:$0xff]
        %v645 = vld [vmem:[%s642 + $0x10] sm:$0xff]
        %v646 = vld [vmem:[%s642 + $0x18] sm:$0xff]
        %648 = vset.pattern.permute.xlu0 0
        %649 = vperm.xlu0 %648, %v643
        %v650 = vpop.permute.xlu0 %649
        %653 = vset.pattern.permute.xlu0 0
        %654 = vperm.xlu0 %653, %v644
        %v655 = vpop.permute.xlu0 %654
        %658 = vset.pattern.permute.xlu0 0
        %659 = vperm.xlu0 %658, %v645
        %v660 = vpop.permute.xlu0 %659
        %663 = vset.pattern.permute.xlu0 0
        %664 = vperm.xlu0 %663, %v646
        %v665 = vpop.permute.xlu0 %664
        %v667 = vmul.f32 %v634, %v650
        %v668 = vmul.f32 %v635, %v650
        %v669 = vmul.f32 %v636, %v655
        %v670 = vmul.f32 %v637, %v655
        %v671 = vmul.f32 %v638, %v660
        %v672 = vmul.f32 %v639, %v660
        %v673 = vmul.f32 %v640, %v665
        %v674 = vmul.f32 %v641, %v665
        %v675 = vadd.f32 %v588, %v667
        %v676 = vadd.f32 %v589, %v668
        %v677 = vadd.f32 %v590, %v669
        %v678 = vadd.f32 %v591, %v670
        %v679 = vadd.f32 %v592, %v671
        %v680 = vadd.f32 %v593, %v672
        %v681 = vadd.f32 %v594, %v673
        %v682 = vadd.f32 %v595, %v674
        %683 = vrot.lane.b32.xlu0 %v468, 7
        %v684 = vpop.permute.xlu0 %683
        %685 = vrot.lane.b32.xlu0 %v470, 7
        %v686 = vpop.permute.xlu0 %685
        %687 = vrot.lane.b32.xlu0 %v472, 7
        %v688 = vpop.permute.xlu0 %687
        %689 = vrot.lane.b32.xlu0 %v474, 7
        %v690 = vpop.permute.xlu0 %689
        %691 = vrot.lane.b32.xlu0 %v469, 7
        %v692 = vpop.permute.xlu0 %691
        %693 = vrot.lane.b32.xlu0 %v471, 7
        %v694 = vpop.permute.xlu0 %693
        %695 = vrot.lane.b32.xlu0 %v473, 7
        %v696 = vpop.permute.xlu0 %695
        %697 = vrot.lane.b32.xlu0 %v475, 7
        %v698 = vpop.permute.xlu0 %697
        %vm699 = vcmp.lt.s32.totalorder %v526, 7
        %v700 = vsel %vm699, %v684, %v692
        %v701 = vsel %vm699, %v686, %v694
        %v702 = vsel %vm699, %v688, %v696
        %v703 = vsel %vm699, %v690, %v698
        %v704 = vsel %vm699, %v692, %v684
        %v705 = vsel %vm699, %v694, %v686
        %v706 = vsel %vm699, %v696, %v688
        %v707 = vsel %vm699, %v698, %v690
        %s708 = scalar_lea.vmem %s7, 4
        %v709 = vld [vmem:[%s708] sm:$0x3]
        %v711 = vlaneseq
        %v712 = vshrl.u32 %v711, 7
        %v713 = vsub.s32 0, %v712
        %v714 = vrot.slane %v709, %v713
        %v715 = vlaneseq
        %v716 = vshrl.u32 %v715, 7
        %v717 = vsub.s32 1, %v716
        %v718 = vrot.slane %v709, %v717
        %v721 = vmul.f32 %v704, %v714
        %v722 = vmul.f32 %v700, %v718
        %v723 = vmul.f32 %v705, %v714
        %v724 = vmul.f32 %v701, %v718
        %v725 = vmul.f32 %v706, %v714
        %v726 = vmul.f32 %v702, %v718
        %v727 = vmul.f32 %v707, %v714
        %v728 = vmul.f32 %v703, %v718
        %s729 = scalar_lea.vmem %s3, 64
        %v730 = vld [vmem:[%s729] sm:$0xff]
        %v731 = vld [vmem:[%s729 + $0x8] sm:$0xff]
        %v732 = vld [vmem:[%s729 + $0x10] sm:$0xff]
        %v733 = vld [vmem:[%s729 + $0x18] sm:$0xff]
        %735 = vset.pattern.permute.xlu0 0
        %736 = vperm.xlu0 %735, %v730
        %v737 = vpop.permute.xlu0 %736
        %740 = vset.pattern.permute.xlu0 0
        %741 = vperm.xlu0 %740, %v731
        %v742 = vpop.permute.xlu0 %741
        %745 = vset.pattern.permute.xlu0 0
        %746 = vperm.xlu0 %745, %v732
        %v747 = vpop.permute.xlu0 %746
        %750 = vset.pattern.permute.xlu0 0
        %751 = vperm.xlu0 %750, %v733
        %v752 = vpop.permute.xlu0 %751
        %v754 = vmul.f32 %v721, %v737
        %v755 = vmul.f32 %v722, %v737
        %v756 = vmul.f32 %v723, %v742
        %v757 = vmul.f32 %v724, %v742
        %v758 = vmul.f32 %v725, %v747
        %v759 = vmul.f32 %v726, %v747
        %v760 = vmul.f32 %v727, %v752
        %v761 = vmul.f32 %v728, %v752
        %v762 = vadd.f32 %v675, %v754
        %v763 = vadd.f32 %v676, %v755
        %v764 = vadd.f32 %v677, %v756
        %v765 = vadd.f32 %v678, %v757
        %v766 = vadd.f32 %v679, %v758
        %v767 = vadd.f32 %v680, %v759
        %v768 = vadd.f32 %v681, %v760
        %v769 = vadd.f32 %v682, %v761
        %770 = vrot.lane.b32.xlu0 %v468, 1
        %v771 = vpop.permute.xlu0 %770
        %772 = vrot.lane.b32.xlu0 %v470, 1
        %v773 = vpop.permute.xlu0 %772
        %774 = vrot.lane.b32.xlu0 %v472, 1
        %v775 = vpop.permute.xlu0 %774
        %776 = vrot.lane.b32.xlu0 %v474, 1
        %v777 = vpop.permute.xlu0 %776
        %778 = vrot.lane.b32.xlu0 %v469, 1
        %v779 = vpop.permute.xlu0 %778
        %780 = vrot.lane.b32.xlu0 %v471, 1
        %v781 = vpop.permute.xlu0 %780
        %782 = vrot.lane.b32.xlu0 %v473, 1
        %v783 = vpop.permute.xlu0 %782
        %784 = vrot.lane.b32.xlu0 %v475, 1
        %v785 = vpop.permute.xlu0 %784
        %vm786 = vcmp.lt.s32.totalorder %v526, 1
        %v787 = vsel %vm786, %v771, %v779
        %v788 = vsel %vm786, %v773, %v781
        %v789 = vsel %vm786, %v775, %v783
        %v790 = vsel %vm786, %v777, %v785
        %v791 = vsel %vm786, %v779, %v771
        %v792 = vsel %vm786, %v781, %v773
        %v793 = vsel %vm786, %v783, %v775
        %v794 = vsel %vm786, %v785, %v777
        %s795 = scalar_lea.vmem %s7, 6
        %v796 = vld [vmem:[%s795] sm:$0x3]
        %v798 = vlaneseq
        %v799 = vshrl.u32 %v798, 7
        %v800 = vsub.s32 0, %v799
        %v801 = vrot.slane %v796, %v800
        %v802 = vlaneseq
        %v803 = vshrl.u32 %v802, 7
        %v804 = vsub.s32 1, %v803
        %v805 = vrot.slane %v796, %v804
        %v808 = vmul.f32 %v791, %v801
        %v809 = vmul.f32 %v787, %v805
        %v810 = vmul.f32 %v792, %v801
        %v811 = vmul.f32 %v788, %v805
        %v812 = vmul.f32 %v793, %v801
        %v813 = vmul.f32 %v789, %v805
        %v814 = vmul.f32 %v794, %v801
        %v815 = vmul.f32 %v790, %v805
        %s816 = scalar_lea.vmem %s3, 96
        %v817 = vld [vmem:[%s816] sm:$0xff]
        %v818 = vld [vmem:[%s816 + $0x8] sm:$0xff]
        %v819 = vld [vmem:[%s816 + $0x10] sm:$0xff]
        %v820 = vld [vmem:[%s816 + $0x18] sm:$0xff]
        %822 = vset.pattern.permute.xlu0 0
        %823 = vperm.xlu0 %822, %v817
        %v824 = vpop.permute.xlu0 %823
        %827 = vset.pattern.permute.xlu0 0
        %828 = vperm.xlu0 %827, %v818
        %v829 = vpop.permute.xlu0 %828
        %832 = vset.pattern.permute.xlu0 0
        %833 = vperm.xlu0 %832, %v819
        %v834 = vpop.permute.xlu0 %833
        %837 = vset.pattern.permute.xlu0 0
        %838 = vperm.xlu0 %837, %v820
        %v839 = vpop.permute.xlu0 %838
        %v841 = vmul.f32 %v808, %v824
        %v842 = vmul.f32 %v809, %v824
        %v843 = vmul.f32 %v810, %v829
        %v844 = vmul.f32 %v811, %v829
        %v845 = vmul.f32 %v812, %v834
        %v846 = vmul.f32 %v813, %v834
        %v847 = vmul.f32 %v814, %v839
        %v848 = vmul.f32 %v815, %v839
        %v849 = vadd.f32 %v762, %v841
        %v850 = vadd.f32 %v763, %v842
        %v851 = vadd.f32 %v764, %v843
        %v852 = vadd.f32 %v765, %v844
        %v853 = vadd.f32 %v766, %v845
        %v854 = vadd.f32 %v767, %v846
        %v855 = vadd.f32 %v768, %v847
        %v856 = vadd.f32 %v769, %v848
        %857 = vrot.lane.b32.xlu0 %v468, 127
        %v858 = vpop.permute.xlu0 %857
        %859 = vrot.lane.b32.xlu0 %v470, 127
        %v860 = vpop.permute.xlu0 %859
        %861 = vrot.lane.b32.xlu0 %v472, 127
        %v862 = vpop.permute.xlu0 %861
        %863 = vrot.lane.b32.xlu0 %v474, 127
        %v864 = vpop.permute.xlu0 %863
        %865 = vrot.lane.b32.xlu0 %v469, 127
        %v866 = vpop.permute.xlu0 %865
        %867 = vrot.lane.b32.xlu0 %v471, 127
        %v868 = vpop.permute.xlu0 %867
        %869 = vrot.lane.b32.xlu0 %v473, 127
        %v870 = vpop.permute.xlu0 %869
        %871 = vrot.lane.b32.xlu0 %v475, 127
        %v872 = vpop.permute.xlu0 %871
        %vm873 = vcmp.lt.s32.totalorder %v526, 127
        %v874 = vsel %vm873, %v858, %v866
        %v875 = vsel %vm873, %v860, %v868
        %v876 = vsel %vm873, %v862, %v870
        %v877 = vsel %vm873, %v864, %v872
        %v878 = vsel %vm873, %v866, %v858
        %v879 = vsel %vm873, %v868, %v860
        %v880 = vsel %vm873, %v870, %v862
        %v881 = vsel %vm873, %v872, %v864
        %s882 = scalar_lea.vmem %s7, 10
        %v883 = vld [vmem:[%s882] sm:$0x3]
        %v885 = vlaneseq
        %v886 = vshrl.u32 %v885, 7
        %v887 = vsub.s32 0, %v886
        %v888 = vrot.slane %v883, %v887
        %v889 = vlaneseq
        %v890 = vshrl.u32 %v889, 7
        %v891 = vsub.s32 1, %v890
        %v892 = vrot.slane %v883, %v891
        %v895 = vmul.f32 %v874, %v888
        %v896 = vmul.f32 %v878, %v892
        %v897 = vmul.f32 %v875, %v888
        %v898 = vmul.f32 %v879, %v892
        %v899 = vmul.f32 %v876, %v888
        %v900 = vmul.f32 %v880, %v892
        %v901 = vmul.f32 %v877, %v888
        %v902 = vmul.f32 %v881, %v892
        %s903 = scalar_lea.vmem %s3, 160
        %v904 = vld [vmem:[%s903] sm:$0xff]
        %v905 = vld [vmem:[%s903 + $0x8] sm:$0xff]
        %v906 = vld [vmem:[%s903 + $0x10] sm:$0xff]
        %v907 = vld [vmem:[%s903 + $0x18] sm:$0xff]
        %909 = vset.pattern.permute.xlu0 0
        %910 = vperm.xlu0 %909, %v904
        %v911 = vpop.permute.xlu0 %910
        %914 = vset.pattern.permute.xlu0 0
        %915 = vperm.xlu0 %914, %v905
        %v916 = vpop.permute.xlu0 %915
        %919 = vset.pattern.permute.xlu0 0
        %920 = vperm.xlu0 %919, %v906
        %v921 = vpop.permute.xlu0 %920
        %924 = vset.pattern.permute.xlu0 0
        %925 = vperm.xlu0 %924, %v907
        %v926 = vpop.permute.xlu0 %925
        %v928 = vmul.f32 %v895, %v911
        %v929 = vmul.f32 %v896, %v911
        %v930 = vmul.f32 %v897, %v916
        %v931 = vmul.f32 %v898, %v916
        %v932 = vmul.f32 %v899, %v921
        %v933 = vmul.f32 %v900, %v921
        %v934 = vmul.f32 %v901, %v926
        %v935 = vmul.f32 %v902, %v926
        %v936 = vadd.f32 %v849, %v928
        %v937 = vadd.f32 %v850, %v929
        %v938 = vadd.f32 %v851, %v930
        %v939 = vadd.f32 %v852, %v931
        %v940 = vadd.f32 %v853, %v932
        %v941 = vadd.f32 %v854, %v933
        %v942 = vadd.f32 %v855, %v934
        %v943 = vadd.f32 %v856, %v935
        %944 = vrot.lane.b32.xlu0 %v468, 121
        %v945 = vpop.permute.xlu0 %944
        %946 = vrot.lane.b32.xlu0 %v470, 121
        %v947 = vpop.permute.xlu0 %946
        %948 = vrot.lane.b32.xlu0 %v472, 121
        %v949 = vpop.permute.xlu0 %948
        %950 = vrot.lane.b32.xlu0 %v474, 121
        %v951 = vpop.permute.xlu0 %950
        %952 = vrot.lane.b32.xlu0 %v469, 121
        %v953 = vpop.permute.xlu0 %952
        %954 = vrot.lane.b32.xlu0 %v471, 121
        %v955 = vpop.permute.xlu0 %954
        %956 = vrot.lane.b32.xlu0 %v473, 121
        %v957 = vpop.permute.xlu0 %956
        %958 = vrot.lane.b32.xlu0 %v475, 121
        %v959 = vpop.permute.xlu0 %958
        %vm960 = vcmp.lt.s32.totalorder %v526, 121
        %v961 = vsel %vm960, %v945, %v953
        %v962 = vsel %vm960, %v947, %v955
        %v963 = vsel %vm960, %v949, %v957
        %v964 = vsel %vm960, %v951, %v959
        %v965 = vsel %vm960, %v953, %v945
        %v966 = vsel %vm960, %v955, %v947
        %v967 = vsel %vm960, %v957, %v949
        %v968 = vsel %vm960, %v959, %v951
        %s969 = scalar_lea.vmem %s7, 12
        %v970 = vld [vmem:[%s969] sm:$0x3]
        %v972 = vlaneseq
        %v973 = vshrl.u32 %v972, 7
        %v974 = vsub.s32 0, %v973
        %v975 = vrot.slane %v970, %v974
        %v976 = vlaneseq
        %v977 = vshrl.u32 %v976, 7
        %v978 = vsub.s32 1, %v977
        %v979 = vrot.slane %v970, %v978
        %v982 = vmul.f32 %v961, %v975
        %v983 = vmul.f32 %v965, %v979
        %v984 = vmul.f32 %v962, %v975
        %v985 = vmul.f32 %v966, %v979
        %v986 = vmul.f32 %v963, %v975
        %v987 = vmul.f32 %v967, %v979
        %v988 = vmul.f32 %v964, %v975
        %v989 = vmul.f32 %v968, %v979
        %s990 = scalar_lea.vmem %s3, 192
        %v991 = vld [vmem:[%s990] sm:$0xff]
        %v992 = vld [vmem:[%s990 + $0x8] sm:$0xff]
        %v993 = vld [vmem:[%s990 + $0x10] sm:$0xff]
        %v994 = vld [vmem:[%s990 + $0x18] sm:$0xff]
        %996 = vset.pattern.permute.xlu0 0
        %997 = vperm.xlu0 %996, %v991
        %v998 = vpop.permute.xlu0 %997
        %1001 = vset.pattern.permute.xlu0 0
        %1002 = vperm.xlu0 %1001, %v992
        %v1003 = vpop.permute.xlu0 %1002
        %1006 = vset.pattern.permute.xlu0 0
        %1007 = vperm.xlu0 %1006, %v993
        %v1008 = vpop.permute.xlu0 %1007
        %1011 = vset.pattern.permute.xlu0 0
        %1012 = vperm.xlu0 %1011, %v994
        %v1013 = vpop.permute.xlu0 %1012
        %v1015 = vmul.f32 %v982, %v998
        %v1016 = vmul.f32 %v983, %v998
        %v1017 = vmul.f32 %v984, %v1003
        %v1018 = vmul.f32 %v985, %v1003
        %v1019 = vmul.f32 %v986, %v1008
        %v1020 = vmul.f32 %v987, %v1008
        %v1021 = vmul.f32 %v988, %v1013
        %v1022 = vmul.f32 %v989, %v1013
        %v1023 = vadd.f32 %v936, %v1015
        %v1024 = vadd.f32 %v937, %v1016
        %v1025 = vadd.f32 %v938, %v1017
        %v1026 = vadd.f32 %v939, %v1018
        %v1027 = vadd.f32 %v940, %v1019
        %v1028 = vadd.f32 %v941, %v1020
        %v1029 = vadd.f32 %v942, %v1021
        %v1030 = vadd.f32 %v943, %v1022
        %1031 = vrot.lane.b32.xlu0 %v468, 120
        %v1032 = vpop.permute.xlu0 %1031
        %1033 = vrot.lane.b32.xlu0 %v470, 120
        %v1034 = vpop.permute.xlu0 %1033
        %1035 = vrot.lane.b32.xlu0 %v472, 120
        %v1036 = vpop.permute.xlu0 %1035
        %1037 = vrot.lane.b32.xlu0 %v474, 120
        %v1038 = vpop.permute.xlu0 %1037
        %1039 = vrot.lane.b32.xlu0 %v469, 120
        %v1040 = vpop.permute.xlu0 %1039
        %1041 = vrot.lane.b32.xlu0 %v471, 120
        %v1042 = vpop.permute.xlu0 %1041
        %1043 = vrot.lane.b32.xlu0 %v473, 120
        %v1044 = vpop.permute.xlu0 %1043
        %1045 = vrot.lane.b32.xlu0 %v475, 120
        %v1046 = vpop.permute.xlu0 %1045
        %vm1047 = vcmp.lt.s32.totalorder %v526, 120
        %v1048 = vsel %vm1047, %v1032, %v1040
        %v1049 = vsel %vm1047, %v1034, %v1042
        %v1050 = vsel %vm1047, %v1036, %v1044
        %v1051 = vsel %vm1047, %v1038, %v1046
        %v1052 = vsel %vm1047, %v1040, %v1032
        %v1053 = vsel %vm1047, %v1042, %v1034
        %v1054 = vsel %vm1047, %v1044, %v1036
        %v1055 = vsel %vm1047, %v1046, %v1038
        %s1056 = scalar_lea.vmem %s7, 14
        %v1057 = vld [vmem:[%s1056] sm:$0x3]
        %v1059 = vlaneseq
        %v1060 = vshrl.u32 %v1059, 7
        %v1061 = vsub.s32 0, %v1060
        %v1062 = vrot.slane %v1057, %v1061
        %v1063 = vlaneseq
        %v1064 = vshrl.u32 %v1063, 7
        %v1065 = vsub.s32 1, %v1064
        %v1066 = vrot.slane %v1057, %v1065
        %v1069 = vmul.f32 %v1048, %v1062
        %v1070 = vmul.f32 %v1052, %v1066
        %v1071 = vmul.f32 %v1049, %v1062
        %v1072 = vmul.f32 %v1053, %v1066
        %v1073 = vmul.f32 %v1050, %v1062
        %v1074 = vmul.f32 %v1054, %v1066
        %v1075 = vmul.f32 %v1051, %v1062
        %v1076 = vmul.f32 %v1055, %v1066
        %s1077 = scalar_lea.vmem %s3, 224
        %v1078 = vld [vmem:[%s1077] sm:$0xff]
        %v1079 = vld [vmem:[%s1077 + $0x8] sm:$0xff]
        %v1080 = vld [vmem:[%s1077 + $0x10] sm:$0xff]
        %v1081 = vld [vmem:[%s1077 + $0x18] sm:$0xff]
        %1083 = vset.pattern.permute.xlu0 0
        %1084 = vperm.xlu0 %1083, %v1078
        %v1085 = vpop.permute.xlu0 %1084
        %1088 = vset.pattern.permute.xlu0 0
        %1089 = vperm.xlu0 %1088, %v1079
        %v1090 = vpop.permute.xlu0 %1089
        %1093 = vset.pattern.permute.xlu0 0
        %1094 = vperm.xlu0 %1093, %v1080
        %v1095 = vpop.permute.xlu0 %1094
        %1098 = vset.pattern.permute.xlu0 0
        %1099 = vperm.xlu0 %1098, %v1081
        %v1100 = vpop.permute.xlu0 %1099
        %v1102 = vmul.f32 %v1069, %v1085
        %v1103 = vmul.f32 %v1070, %v1085
        %v1104 = vmul.f32 %v1071, %v1090
        %v1105 = vmul.f32 %v1072, %v1090
        %v1106 = vmul.f32 %v1073, %v1095
        %v1107 = vmul.f32 %v1074, %v1095
        %v1108 = vmul.f32 %v1075, %v1100
        %v1109 = vmul.f32 %v1076, %v1100
        %v1110 = vadd.f32 %v1023, %v1102
        %v1111 = vadd.f32 %v1024, %v1103
        %v1112 = vadd.f32 %v1025, %v1104
        %v1113 = vadd.f32 %v1026, %v1105
        %v1114 = vadd.f32 %v1027, %v1106
        %v1115 = vadd.f32 %v1028, %v1107
        %v1116 = vadd.f32 %v1029, %v1108
        %v1117 = vadd.f32 %v1030, %v1109
        %1118 = vrot.lane.b32.xlu0 %v468, 119
        %v1119 = vpop.permute.xlu0 %1118
        %1120 = vrot.lane.b32.xlu0 %v470, 119
        %v1121 = vpop.permute.xlu0 %1120
        %1122 = vrot.lane.b32.xlu0 %v472, 119
        %v1123 = vpop.permute.xlu0 %1122
        %1124 = vrot.lane.b32.xlu0 %v474, 119
        %v1125 = vpop.permute.xlu0 %1124
        %1126 = vrot.lane.b32.xlu0 %v469, 119
        %v1127 = vpop.permute.xlu0 %1126
        %1128 = vrot.lane.b32.xlu0 %v471, 119
        %v1129 = vpop.permute.xlu0 %1128
        %1130 = vrot.lane.b32.xlu0 %v473, 119
        %v1131 = vpop.permute.xlu0 %1130
        %1132 = vrot.lane.b32.xlu0 %v475, 119
        %v1133 = vpop.permute.xlu0 %1132
        %vm1134 = vcmp.lt.s32.totalorder %v526, 119
        %v1135 = vsel %vm1134, %v1119, %v1127
        %v1136 = vsel %vm1134, %v1121, %v1129
        %v1137 = vsel %vm1134, %v1123, %v1131
        %v1138 = vsel %vm1134, %v1125, %v1133
        %v1139 = vsel %vm1134, %v1127, %v1119
        %v1140 = vsel %vm1134, %v1129, %v1121
        %v1141 = vsel %vm1134, %v1131, %v1123
        %v1142 = vsel %vm1134, %v1133, %v1125
        %s1143 = scalar_lea.vmem %s7, 16
        %v1144 = vld [vmem:[%s1143] sm:$0x3]
        %v1146 = vlaneseq
        %v1147 = vshrl.u32 %v1146, 7
        %v1148 = vsub.s32 0, %v1147
        %v1149 = vrot.slane %v1144, %v1148
        %v1150 = vlaneseq
        %v1151 = vshrl.u32 %v1150, 7
        %v1152 = vsub.s32 1, %v1151
        %v1153 = vrot.slane %v1144, %v1152
        %v1156 = vmul.f32 %v1135, %v1149
        %v1157 = vmul.f32 %v1139, %v1153
        %v1158 = vmul.f32 %v1136, %v1149
        %v1159 = vmul.f32 %v1140, %v1153
        %v1160 = vmul.f32 %v1137, %v1149
        %v1161 = vmul.f32 %v1141, %v1153
        %v1162 = vmul.f32 %v1138, %v1149
        %v1163 = vmul.f32 %v1142, %v1153
        %s1164 = scalar_lea.vmem %s3, 256
        %v1165 = vld [vmem:[%s1164] sm:$0xff]
        %v1166 = vld [vmem:[%s1164 + $0x8] sm:$0xff]
        %v1167 = vld [vmem:[%s1164 + $0x10] sm:$0xff]
        %v1168 = vld [vmem:[%s1164 + $0x18] sm:$0xff]
        %1170 = vset.pattern.permute.xlu0 0
        %1171 = vperm.xlu0 %1170, %v1165
        %v1172 = vpop.permute.xlu0 %1171
        %1175 = vset.pattern.permute.xlu0 0
        %1176 = vperm.xlu0 %1175, %v1166
        %v1177 = vpop.permute.xlu0 %1176
        %1180 = vset.pattern.permute.xlu0 0
        %1181 = vperm.xlu0 %1180, %v1167
        %v1182 = vpop.permute.xlu0 %1181
        %1185 = vset.pattern.permute.xlu0 0
        %1186 = vperm.xlu0 %1185, %v1168
        %v1187 = vpop.permute.xlu0 %1186
        %v1189 = vmul.f32 %v1156, %v1172
        %v1190 = vmul.f32 %v1157, %v1172
        %v1191 = vmul.f32 %v1158, %v1177
        %v1192 = vmul.f32 %v1159, %v1177
        %v1193 = vmul.f32 %v1160, %v1182
        %v1194 = vmul.f32 %v1161, %v1182
        %v1195 = vmul.f32 %v1162, %v1187
        %v1196 = vmul.f32 %v1163, %v1187
        %v1197 = vadd.f32 %v1110, %v1189
        %v1198 = vadd.f32 %v1111, %v1190
        %v1199 = vadd.f32 %v1112, %v1191
        %v1200 = vadd.f32 %v1113, %v1192
        %v1201 = vadd.f32 %v1114, %v1193
        %v1202 = vadd.f32 %v1115, %v1194
        %v1203 = vadd.f32 %v1116, %v1195
        %v1204 = vadd.f32 %v1117, %v1196
        %v1205 = vld [vmem:[%s4] sm:$0xff]
        %v1206 = vld [vmem:[%s4 + $0x8] sm:$0xff]
        %v1207 = vld [vmem:[%s4 + $0x10] sm:$0xff]
        %v1208 = vld [vmem:[%s4 + $0x18] sm:$0xff]
        %1210 = vset.pattern.permute.xlu0 0
        %1211 = vperm.xlu0 %1210, %v1205
        %v1212 = vpop.permute.xlu0 %1211
        %1215 = vset.pattern.permute.xlu0 0
        %1216 = vperm.xlu0 %1215, %v1206
        %v1217 = vpop.permute.xlu0 %1216
        %1220 = vset.pattern.permute.xlu0 0
        %1221 = vperm.xlu0 %1220, %v1207
        %v1222 = vpop.permute.xlu0 %1221
        %1225 = vset.pattern.permute.xlu0 0
        %1226 = vperm.xlu0 %1225, %v1208
        %v1227 = vpop.permute.xlu0 %1226
        %v1229 = vadd.f32 %v1197, %v1212
        %v1230 = vadd.f32 %v1198, %v1212
        %v1231 = vadd.f32 %v1199, %v1217
        %v1232 = vadd.f32 %v1200, %v1217
        %v1233 = vadd.f32 %v1201, %v1222
        %v1234 = vadd.f32 %v1202, %v1222
        %v1235 = vadd.f32 %v1203, %v1227
        %v1236 = vadd.f32 %v1204, %v1227
        %v1237 = vmax.f32 %v1229, 0.0
        %v1238 = vmax.f32 %v1230, 0.0
        %v1239 = vmax.f32 %v1231, 0.0
        %v1240 = vmax.f32 %v1232, 0.0
        %v1241 = vmax.f32 %v1233, 0.0
        %v1242 = vmax.f32 %v1234, 0.0
        %v1243 = vmax.f32 %v1235, 0.0
        %v1244 = vmax.f32 %v1236, 0.0
        %v1245 = vld [vmem:[%s5] sm:$0xff]
        %v1246 = vld [vmem:[%s5 + $0x8] sm:$0xff]
        %v1247 = vld [vmem:[%s6] sm:$0xff]
        %v1248 = vld [vmem:[%s6 + $0x8] sm:$0xff]
        %1250 = vset.pattern.permute.xlu0 0
        %1251 = vperm.xlu0 %1250, %v1247
        %v1252 = vpop.permute.xlu0 %1251
        %1255 = vset.pattern.permute.xlu0 0
        %1256 = vperm.xlu0 %1255, %v1248
        %v1257 = vpop.permute.xlu0 %1256
        %vm1259 = vcmask 261120
        %v1261 = vsel %vm1259, %v1245, 0
        %v1264 = vsel %vm1259, %v1246, 0
        %1266 = vmatprep.subr.mxu0 %v1238
        %1267 = vmatpush1.msra.mxu0 %v1237
        %1268 = vmatprep.subr.mxu0 %v1240
        %1269 = vmatpush1.msra.mxu0 %v1239
        %1270 = vmatprep.subr.mxu0 %v1242
        %1271 = vmatpush1.msra.mxu0 %v1241
        %1272 = vmatprep.subr.mxu0 %v1244
        %1273 = vmatpush1.msra.mxu0 %v1243
        %1274 = vmatprep.subr.mxu0 0.0
        %1275 = vmatpush1.msra.mxu0 0.0
        %1276 = vmatprep.subr.mxu0 0.0
        %1277 = vmatpush1.msra.mxu0 0.0
        %1278 = vmatprep.subr.mxu0 0.0
        %1279 = vmatpush1.msra.mxu0 0.0
        %1280 = vmatprep.subr.mxu0 0.0
        %1281 = vmatpush1.msra.mxu0 0.0
        %1282 = vmatprep.subr.mxu0 0.0
        %1283 = vmatpush1.msra.mxu0 0.0
        %1284 = vmatprep.subr.mxu0 0.0
        %1285 = vmatpush1.msra.mxu0 0.0
        %1286 = vmatprep.subr.mxu0 0.0
        %1287 = vmatpush1.msra.mxu0 0.0
        %1288 = vmatprep.subr.mxu0 0.0
        %1289 = vmatpush1.msra.mxu0 0.0
        %1290 = vmatprep.subr.mxu0 0.0
        %1291 = vmatpush1.msra.mxu0 0.0
        %1292 = vmatprep.subr.mxu0 0.0
        %1293 = vmatpush1.msra.mxu0 0.0
        %1294 = vmatprep.subr.mxu0 0.0
        %1295 = vmatpush1.msra.mxu0 0.0
        %1296 = vmatprep.subr.mxu0 0.0
        %1297 = vmatpush1.msra.mxu0 0.0
        %1298 = vmatprep.subr.mxu0 0.0
        %1299 = vmatpush1.msra.mxu0 0.0
        %1300 = vmatprep.subr.mxu0 0.0
        %1301 = vmatpush1.msra.mxu0 0.0
        %1302 = vmatprep.subr.mxu0 0.0
        %1303 = vmatpush1.msra.mxu0 0.0
        %1304 = vmatprep.subr.mxu0 0.0
        %1305 = vmatpush1.msra.mxu0 0.0
        %1306 = vmatprep.subr.mxu0 0.0
        %1307 = vmatpush1.msra.mxu0 0.0
        %1308 = vmatprep.subr.mxu0 0.0
        %1309 = vmatpush1.msra.mxu0 0.0
        %1310 = vmatprep.subr.mxu0 0.0
        %1311 = vmatpush1.msra.mxu0 0.0
        %1312 = vmatprep.subr.mxu0 0.0
        %1313 = vmatpush1.msra.mxu0 0.0
        %1314 = vmatprep.subr.mxu0 0.0
        %1315 = vmatpush1.msra.mxu0 0.0
        %1316 = vmatprep.subr.mxu0 0.0
        %1317 = vmatpush1.msra.mxu0 0.0
        %1318 = vmatprep.subr.mxu0 0.0
        %1319 = vmatpush1.msra.mxu0 0.0
        %1320 = vmatprep.subr.mxu0 0.0
        %1321 = vmatpush1.msra.mxu0 0.0
        %1322 = vmatprep.subr.mxu0 0.0
        %1323 = vmatpush1.msra.mxu0 0.0
        %1324 = vmatprep.subr.mxu0 0.0
        %1325 = vmatpush1.msra.mxu0 0.0
        %1326 = vmatprep.subr.mxu0 0.0
        %1327 = vmatpush1.msra.mxu0 0.0
        %1328 = vmatprep.subr.mxu0 0.0
        %1329 = vmatpush1.msra.mxu0 0.0
        %1330 = vmatprep.mubr.f32.mxu0 0.0
        %1331 = vmatmul.mubr.f32.gmra.mrb[0].mxu0 %v1261
        %v1332 = vpop.f32.mrb[0].mxu0
        %v1333 = vadd.f32 %v1252, %v1332
        %v1334 = vpop.f32.mrb[0].mxu0
        %v1335 = vadd.f32 %v1252, %v1334
        %1336 = vmatprep.mubr.f32.mxu0 0.0
        %1337 = vmatmul.mubr.f32.gmra.mrb[0].mxu0 %v1264
        %v1338 = vpop.f32.mrb[0].mxu0
        %v1339 = vadd.f32 %v1257, %v1338
        %v1340 = vpop.f32.mrb[0].mxu0
        %v1341 = vadd.f32 %v1257, %v1340
        %1342 = vdwg.mxu0
        %v1343 = vadd.f32 %v1333, %v458
        %v1344 = vadd.f32 %v1335, %v460
        %v1345 = vadd.f32 %v1339, %v464
        %v1346 = vadd.f32 %v1341, %v466
        %1347 = vst [vmem:[%s298] sm:$0xff] %v1343
        %1348 = vst [vmem:[%s298 + $0x8] sm:$0xff] %v1344
        %1349 = vst [vmem:[%s298 + $0x10] sm:$0xff] %v1345
        %1350 = vst [vmem:[%s298 + $0x18] sm:$0xff] %v1346
        %s1351 = sand.u32 %s203, 1
        %s1352 = scalar_lea.sflag [#allocation3], %s1351
        %s1353 = sand.u32 %s203, 1
        %s1354 = smul.addr %s1353, 32
        %s1355 = scalar_lea.vmem [#allocation2], %s1354
        // Predicated region
        $region53: #{tpu_custom_call.1} parent=51 // pred_check
          %p1356 = pneg %p213
        $region54: #{tpu_custom_call.1} parent=51 // pred_check_branch
          %1358 = sbr.rel (%p1356) target = $region56
        $region55: #{tpu_custom_call.1} parent=51 // pred_region
          %s1360 = ssub.s32 512, 512
          %1361 = vsyncadd %s1352, %s1360
          %s1362 = smul.addr %s22, 4
          %s1363 = smul.addr %s1362, 128
          %s1364 = scalar_lea.hbm %s8, %s1363
          %s1365 = sshll.u32 %s1355, 4
          %s1366 = int_to_ptr.vmem [resolvable:$true] %s1365
          %1371 = dma.vmem_to_hbm [thread:$0]  %s1366, 512, %s1364, %s1352, 256, 256, 16
        $region56: #{tpu_custom_call.1} parent=51 // pred_fallthru
          _
      $region52: #{tpu_custom_call.1} parent=5 // pred_fallthru
        _
      %p1372 = scmp.le.s32.totalorder 2, %s17
      // Predicated region
      $region57: #{tpu_custom_call.1} parent=5 // pred_check
        %p1373 = pneg %p1372
      $region58: #{tpu_custom_call.1} parent=5 // pred_check_branch
        %1375 = sbr.rel (%p1373) target = $region60
      $region59: #{tpu_custom_call.1} parent=5 // pred_region
        %s1376 = ssub.s32 %s17, 2
        // Predicated region
        $region61: #{tpu_custom_call.1} parent=59 // pred_check
          %p1377 = pneg %p219
        $region62: #{tpu_custom_call.1} parent=59 // pred_check_branch
          %1379 = sbr.rel (%p1377) target = $region64
        $region63: #{tpu_custom_call.1} parent=59 // pred_region
          %s1380 = sand.u32 %s204, 1
          %s1381 = scalar_lea.sflag [#allocation3], %s1380
          %s1382 = sand.u32 %s204, 1
          %s1383 = smul.addr %s1382, 32
          %s1384 = scalar_lea.vmem [#allocation2], %s1383
          %1385 = dma.done %s1381, 512
        $region64: #{tpu_custom_call.1} parent=59 // pred_fallthru
          _
      $region60: #{tpu_custom_call.1} parent=5 // pred_fallthru
        _
    $region6: #{tpu_custom_call.1} parent=1 // loop_footer
      %s21 = sadd.s32 1, %s17
    $region7: #{tpu_custom_call.1} parent=1 // loop_footer_branch
      %16 = sbr.rel target = $region3
    $region8: #{tpu_custom_call.1} parent=1 // loop_exit
      _
    %1386 = vsyncpa [#allocation3], 1
    %s1387 = scalar_lea.sflag [#allocation3], 1
    %1388 = vsyncpa %s1387, 1

</llo_original>
